<compile_context>
chip_gen: v6e
topology: v6e:2x2x1
jax: 0.10.0
libtpu: 0.0.40
codegen_flags: <defaults>
</compile_context>

<pallas_src>
import numpy as np

import jax
import jax.numpy as jnp
from jax import lax
from jax.experimental import pallas as pl
from jax.experimental.pallas import tpu as pltpu


def _build_moving_avg_matrix(L, kernel_size):
    """(L, L) matrix M with M @ z == AvgPool1d(kernel_size, stride=1) applied
    to the edge-replication-padded series z (intended Autoformer moving_avg)."""
    pad = (kernel_size - 1) // 2
    A = np.zeros((L, L), np.float32)
    inv = 1.0 / float(kernel_size)
    for i in range(L):
        for j in range(i - pad, i + pad + 1):
            A[i, min(max(j, 0), L - 1)] += inv
    return jnp.asarray(A)


def make_encoder_layer(L, d_model, d_ff, kernel_size=25, *, block_b=1,
                       ff_chunk=512, output_attention=True):
    scale = 1.0 / float(np.sqrt(d_model))          # single-head FullAttention
    ff_chunk = min(ff_chunk, d_ff)
    assert d_ff % ff_chunk == 0, "d_ff must be divisible by ff_chunk"
    n_ff = d_ff // ff_chunk
    A_band = _build_moving_avg_matrix(L, kernel_size)

    bf16 = jnp.bfloat16
    f32 = jnp.float32

    def _body(x_ref, A_ref, wq_ref, wk_ref, wv_ref, wo_ref, w1r_ref, w2r_ref,
              res_ref, attn_ref):
        x = x_ref[...].astype(f32)                       # (Bt, L, D)
        x2 = x.reshape(block_b * L, d_model)             # dense M dimension
        x2b = x2.astype(bf16)

        # ---- single-head full attention (bf16 MXU inputs, f32 accumulate) ----
        # weight refs already hold bf16 (cast once in the wrapper).
        q = jnp.dot(x2b, wq_ref[...], preferred_element_type=f32) * scale
        k = jnp.dot(x2b, wk_ref[...], preferred_element_type=f32)
        v = jnp.dot(x2b, wv_ref[...], preferred_element_type=f32)
        q3 = q.reshape(block_b, L, d_model).astype(bf16)
        k3 = k.reshape(block_b, L, d_model).astype(bf16)
        v3 = v.reshape(block_b, L, d_model).astype(bf16)

        # contract last dims directly -> no explicit k transpose materialized
        s = jnp.einsum('bld,bmd->blm', q3, k3, preferred_element_type=f32)
        m = jnp.max(s, axis=-1, keepdims=True)
        p = jnp.exp(s - m)
        denom = jnp.sum(p, axis=-1, keepdims=True)
        attn = p * pl.reciprocal(denom, approx=True)      # EUP, not VALU divide

        ctx = jnp.einsum('blm,bmd->bld', attn.astype(bf16), v3,
                         preferred_element_type=f32)
        new_x = jnp.dot(ctx.reshape(block_b * L, d_model).astype(bf16),
                        wo_ref[...], preferred_element_type=f32)

        x1 = x2 + new_x                                   # dropout == identity

        # ---- decomp1: seasonal = x1 - moving_avg(x1) via band matrix (MXU) ----
        A3 = jnp.broadcast_to(A_ref[...], (block_b, L, L))   # hoisted, reused
        x1_3 = x1.reshape(block_b, L, d_model)
        x_s3 = x1_3 - jnp.einsum('blm,bmd->bld', A3, x1_3,
                                 preferred_element_type=f32)
        x_s = x_s3.reshape(block_b * L, d_model)
        x_sb = x_s.astype(bf16)

        # ---- feed-forward (1x1 convs), chunked over d_ff ----
        def ff_body(c, acc):
            w1c = w1r_ref[c]                              # (D, ff_chunk) bf16
            w2c = w2r_ref[c]                              # (ff_chunk, D) bf16
            h = jnp.maximum(jnp.dot(x_sb, w1c, preferred_element_type=f32), 0.0)
            return acc + jnp.dot(h.astype(bf16), w2c, preferred_element_type=f32)

        y = lax.fori_loop(0, n_ff, ff_body,
                          jnp.zeros((block_b * L, d_model), f32),
                          unroll=True)

        # ---- decomp2 on (y + x_s) ----
        z3 = (y + x_s).reshape(block_b, L, d_model)
        res = z3 - jnp.einsum('blm,bmd->bld', A3, z3, preferred_element_type=f32)

        res_ref[...] = res.astype(res_ref.dtype)
        if attn_ref is not None:
            attn_ref[...] = attn.astype(attn_ref.dtype)

    if output_attention:
        def kernel(x_ref, A_ref, wq_ref, wk_ref, wv_ref, wo_ref,
                   w1r_ref, w2r_ref, res_ref, attn_ref):
            _body(x_ref, A_ref, wq_ref, wk_ref, wv_ref, wo_ref,
                  w1r_ref, w2r_ref, res_ref, attn_ref)
    else:
        def kernel(x_ref, A_ref, wq_ref, wk_ref, wv_ref, wo_ref,
                   w1r_ref, w2r_ref, res_ref):
            _body(x_ref, A_ref, wq_ref, wk_ref, wv_ref, wo_ref,
                  w1r_ref, w2r_ref, res_ref, None)

    def forward(x, wq, wk, wv, wo, w1, w2):
        B = x.shape[0]
        assert B % block_b == 0, "batch must be divisible by block_b"
        grid = (B // block_b,)

        # Cast weights to bf16 ONCE outside the kernel (halves weight DMA /
        # VMEM and removes per-grid-step in-kernel casts).
        wq_b = wq.astype(bf16)
        wk_b = wk.astype(bf16)
        wv_b = wv.astype(bf16)
        wo_b = wo.astype(bf16)
        # 1x1-conv weights reshaped so d_ff chunks are indexed on the leading
        # axis inside the kernel (cheap dynamic sublane-dim indexing).
        w1r = w1.astype(bf16).reshape(d_model, n_ff, ff_chunk).transpose(1, 0, 2)
        w2r = w2.astype(bf16).reshape(n_ff, ff_chunk, d_model)

        def full_spec(shape):
            return pl.BlockSpec(shape, lambda b: (0,) * len(shape))

        # NOTE: at production sizes the constant-index weight specs can be
        # single-buffered (pipeline_mode=pl.Buffered(1)) to halve their VMEM
        # footprint; kept default-buffered here for portability.
        in_specs = [
            pl.BlockSpec((block_b, L, d_model), lambda b: (b, 0, 0)),
            full_spec((L, L)),
            full_spec((d_model, d_model)),
            full_spec((d_model, d_model)),
            full_spec((d_model, d_model)),
            full_spec((d_model, d_model)),
            full_spec((n_ff, d_model, ff_chunk)),
            full_spec((n_ff, ff_chunk, d_model)),
        ]
        res_spec = pl.BlockSpec((block_b, L, d_model), lambda b: (b, 0, 0))
        res_shape = jax.ShapeDtypeStruct((B, L, d_model), x.dtype)
        if output_attention:
            out_specs = (res_spec,
                         pl.BlockSpec((block_b, L, L), lambda b: (b, 0, 0)))
            out_shape = (res_shape, jax.ShapeDtypeStruct((B, L, L), jnp.float32))
        else:
            out_specs = res_spec
            out_shape = res_shape

        # Explicit VMEM budget: resident bf16 weights + f32 band matrix +
        # double-buffered I/O blocks + live f32 intermediates, with headroom,
        # clamped to v7x's 64 MiB.
        wbytes = 2 * (4 * d_model * d_model + 2 * d_model * d_ff) + 4 * L * L
        iobytes = 4 * block_b * L * (2 * d_model + (L if output_attention else 0))
        actbytes = 4 * block_b * L * (10 * d_model + 4 * L + 2 * ff_chunk)
        vmem_limit = int(min(max(2 * (2 * wbytes + 2 * iobytes + actbytes),
                                 32 * 1024 * 1024), 64 * 1024 * 1024))

        return pl.pallas_call(
            kernel,
            out_shape=out_shape,
            grid_spec=pltpu.PrefetchScalarGridSpec(
                num_scalar_prefetch=0,
                grid=grid,
                in_specs=in_specs,
                out_specs=out_specs,
            ),
            compiler_params=pltpu.CompilerParams(
                dimension_semantics=("parallel",),
                vmem_limit_bytes=vmem_limit),
        )(x, A_band, wq_b, wk_b, wv_b, wo_b, w1r, w2r)

    return forward


def reference_encoder_layer(x, wq, wk, wv, wo, w1, w2, kernel_size=25):
    """Plain-JAX reference (intended Autoformer semantics) mirroring the
    kernel's bf16-matmul / f32-accumulate precision choices."""
    B, L, D = x.shape
    pad = (kernel_size - 1) // 2
    scale = 1.0 / np.sqrt(D)
    bf = jnp.bfloat16
    f32 = jnp.float32

    def mavg(z):
        front = jnp.repeat(z[:, :1, :], pad, axis=1)
        end = jnp.repeat(z[:, -1:, :], pad, axis=1)
        zp = jnp.concatenate([front, z, end], axis=1)
        acc = jnp.zeros_like(z)
        for k in range(kernel_size):
            acc = acc + zp[:, k:k + L, :]
        return acc / kernel_size

    xb = x.astype(bf)
    q = jnp.einsum('bld,de->ble', xb, wq.astype(bf),
                   preferred_element_type=f32) * scale
    k = jnp.einsum('bld,de->ble', xb, wk.astype(bf), preferred_element_type=f32)
    v = jnp.einsum('bld,de->ble', xb, wv.astype(bf), preferred_element_type=f32)
    s = jnp.einsum('ble,bme->blm', q.astype(bf), k.astype(bf),
                   preferred_element_type=f32)
    attn = jax.nn.softmax(s, axis=-1)
    ctx = jnp.einsum('blm,bme->ble', attn.astype(bf), v.astype(bf),
                     preferred_element_type=f32)
    new_x = jnp.einsum('ble,ed->bld', ctx.astype(bf), wo.astype(bf),
                       preferred_element_type=f32)

    x1 = x.astype(f32) + new_x
    x_s = x1 - mavg(x1)
    h = jnp.maximum(jnp.einsum('bld,df->blf', x_s.astype(bf), w1.astype(bf),
                               preferred_element_type=f32), 0.0)
    y = jnp.einsum('blf,fd->bld', h.astype(bf), w2.astype(bf),
                   preferred_element_type=f32)
    z = y + x_s
    res = z - mavg(z)
    return res, attn


if __name__ == "__main__":
    B, L, d_model, d_ff, kernel_size = 4, 16, 32, 256, 25

    key = jax.random.PRNGKey(0)
    ks = jax.random.split(key, 7)
    x = jax.random.normal(ks[0], (B, L, d_model), dtype=jnp.float32)
    wq = 0.1 * jax.random.normal(ks[1], (d_model, d_model), dtype=jnp.float32)
    wk = 0.1 * jax.random.normal(ks[2], (d_model, d_model), dtype=jnp.float32)
    wv = 0.1 * jax.random.normal(ks[3], (d_model, d_model), dtype=jnp.float32)
    wo = 0.1 * jax.random.normal(ks[4], (d_model, d_model), dtype=jnp.float32)
    w1 = 0.1 * jax.random.normal(ks[5], (d_model, d_ff), dtype=jnp.float32)
    w2 = 0.1 * jax.random.normal(ks[6], (d_ff, d_model), dtype=jnp.float32)

    fwd = make_encoder_layer(L, d_model, d_ff, kernel_size,
                             block_b=2, ff_chunk=128, output_attention=True)
    res, attn = jax.jit(fwd)(x, wq, wk, wv, wo, w1, w2)
    jax.block_until_ready((res, attn))

    res_ref, attn_ref = reference_encoder_layer(x, wq, wk, wv, wo, w1, w2,
                                                kernel_size)
    np.testing.assert_allclose(np.asarray(attn), np.asarray(attn_ref),
                               atol=5e-3, rtol=5e-3)
    np.testing.assert_allclose(np.asarray(res), np.asarray(res_ref),
                               atol=2e-2, rtol=2e-2)

    print("KERNEL_OK")
</pallas_src>

<mosaic_0001>
module attributes {stable_mosaic.version = 11 : i64} {
  func.func @kernel(%arg0: i32, %arg1: memref<2x16x32xf32, #tpu.memory_space<vmem>>, %arg2: memref<16x16xf32, #tpu.memory_space<vmem>>, %arg3: memref<32x32xbf16, #tpu.memory_space<vmem>>, %arg4: memref<32x32xbf16, #tpu.memory_space<vmem>>, %arg5: memref<32x32xbf16, #tpu.memory_space<vmem>>, %arg6: memref<32x32xbf16, #tpu.memory_space<vmem>>, %arg7: memref<2x32x128xbf16, #tpu.memory_space<vmem>>, %arg8: memref<2x128x32xbf16, #tpu.memory_space<vmem>>, %arg9: memref<2x16x32xf32, #tpu.memory_space<vmem>>, %arg10: memref<2x16x16xf32, #tpu.memory_space<vmem>>) attributes {dimension_semantics = [#tpu.dimension_semantics<parallel>], iteration_bounds = array<i64: 2>, scalar_prefetch = 0 : i64, scratch_operands = 0 : i64, tpu.core_type = #tpu.core_type<tc>, window_params = [{transform_indices = @transform_0, window_bounds = array<i64: 2, 16, 32>}, {pipeline_mode = #tpu.pipeline_mode<synchronous>, transform_indices = @transform_1, window_bounds = array<i64: 16, 16>}, {pipeline_mode = #tpu.pipeline_mode<synchronous>, transform_indices = @transform_2, window_bounds = array<i64: 32, 32>}, {pipeline_mode = #tpu.pipeline_mode<synchronous>, transform_indices = @transform_3, window_bounds = array<i64: 32, 32>}, {pipeline_mode = #tpu.pipeline_mode<synchronous>, transform_indices = @transform_4, window_bounds = array<i64: 32, 32>}, {pipeline_mode = #tpu.pipeline_mode<synchronous>, transform_indices = @transform_5, window_bounds = array<i64: 32, 32>}, {pipeline_mode = #tpu.pipeline_mode<synchronous>, transform_indices = @transform_6, window_bounds = array<i64: 2, 32, 128>}, {pipeline_mode = #tpu.pipeline_mode<synchronous>, transform_indices = @transform_7, window_bounds = array<i64: 2, 128, 32>}, {transform_indices = @transform_8, window_bounds = array<i64: 2, 16, 32>}, {transform_indices = @transform_9, window_bounds = array<i64: 2, 16, 16>}]} {
    %c0 = arith.constant 0 : index
    %c0_0 = arith.constant 0 : index
    %c0_1 = arith.constant 0 : index
    %0 = vector.load %arg1[%c0, %c0_0, %c0_1] : memref<2x16x32xf32, #tpu.memory_space<vmem>>, vector<2x16x32xf32>
    %1 = vector.shape_cast %0 : vector<2x16x32xf32> to vector<32x32xf32>
    %2 = arith.truncf %1 : vector<32x32xf32> to vector<32x32xbf16>
    %c0_2 = arith.constant 0 : index
    %c0_3 = arith.constant 0 : index
    %3 = vector.load %arg3[%c0_2, %c0_3] : memref<32x32xbf16, #tpu.memory_space<vmem>>, vector<32x32xbf16>
    %cst = arith.constant dense<0.000000e+00> : vector<32x32xf32>
    %4 = tpu.matmul %2, %3, %cst {dimension_numbers = #tpu.dot_dimension_numbers<[1], [0], [0], [1], [0, 0, 1, 1], [], []>} : vector<32x32xbf16>, vector<32x32xbf16>, vector<32x32xf32> -> vector<32x32xf32>
    %cst_4 = arith.constant 0.176776692 : f32
    %5 = vector.broadcast %cst_4 : f32 to vector<32x32xf32>
    %6 = arith.mulf %4, %5 : vector<32x32xf32>
    %c0_5 = arith.constant 0 : index
    %c0_6 = arith.constant 0 : index
    %7 = vector.load %arg4[%c0_5, %c0_6] : memref<32x32xbf16, #tpu.memory_space<vmem>>, vector<32x32xbf16>
    %cst_7 = arith.constant dense<0.000000e+00> : vector<32x32xf32>
    %8 = tpu.matmul %2, %7, %cst_7 {dimension_numbers = #tpu.dot_dimension_numbers<[1], [0], [0], [1], [0, 0, 1, 1], [], []>} : vector<32x32xbf16>, vector<32x32xbf16>, vector<32x32xf32> -> vector<32x32xf32>
    %c0_8 = arith.constant 0 : index
    %c0_9 = arith.constant 0 : index
    %9 = vector.load %arg5[%c0_8, %c0_9] : memref<32x32xbf16, #tpu.memory_space<vmem>>, vector<32x32xbf16>
    %cst_10 = arith.constant dense<0.000000e+00> : vector<32x32xf32>
    %10 = tpu.matmul %2, %9, %cst_10 {dimension_numbers = #tpu.dot_dimension_numbers<[1], [0], [0], [1], [0, 0, 1, 1], [], []>} : vector<32x32xbf16>, vector<32x32xbf16>, vector<32x32xf32> -> vector<32x32xf32>
    %11 = vector.shape_cast %6 : vector<32x32xf32> to vector<2x16x32xf32>
    %12 = arith.truncf %11 : vector<2x16x32xf32> to vector<2x16x32xbf16>
    %13 = vector.shape_cast %8 : vector<32x32xf32> to vector<2x16x32xf32>
    %14 = arith.truncf %13 : vector<2x16x32xf32> to vector<2x16x32xbf16>
    %15 = vector.shape_cast %10 : vector<32x32xf32> to vector<2x16x32xf32>
    %16 = arith.truncf %15 : vector<2x16x32xf32> to vector<2x16x32xbf16>
    "tpu.trace_start"() <{level = 10 : i32, message = "bld,bmd->blm"}> : () -> ()
    %cst_11 = arith.constant dense<0.000000e+00> : vector<2x16x16xf32>
    %17 = tpu.matmul %12, %14, %cst_11 {dimension_numbers = #tpu.dot_dimension_numbers<[2], [2], [1], [1], [0, 0, 0, 1, 1, 1], [0], [0]>} : vector<2x16x32xbf16>, vector<2x16x32xbf16>, vector<2x16x16xf32> -> vector<2x16x16xf32>
    "tpu.trace_stop"() : () -> ()
    %cst_12 = arith.constant dense<0xFF800000> : vector<2x16xf32>
    %18 = vector.multi_reduction <maximumf>, %17, %cst_12 [2] : vector<2x16x16xf32> to vector<2x16xf32>
    %19 = vector.shape_cast %18 : vector<2x16xf32> to vector<2x16x1xf32>
    %20 = vector.broadcast %19 : vector<2x16x1xf32> to vector<2x16x16xf32>
    %21 = arith.subf %17, %20 : vector<2x16x16xf32>
    %22 = math.exp %21 : vector<2x16x16xf32>
    %cst_13 = arith.constant dense<0.000000e+00> : vector<2x16xf32>
    %23 = vector.multi_reduction <add>, %22, %cst_13 [2] : vector<2x16x16xf32> to vector<2x16xf32>
    %24 = vector.shape_cast %23 : vector<2x16xf32> to vector<2x16x1xf32>
    %25 = tpu.reciprocal %24 {approx = true} : vector<2x16x1xf32> -> vector<2x16x1xf32>
    %26 = vector.broadcast %25 : vector<2x16x1xf32> to vector<2x16x16xf32>
    %27 = arith.mulf %22, %26 : vector<2x16x16xf32>
    %28 = arith.truncf %27 : vector<2x16x16xf32> to vector<2x16x16xbf16>
    "tpu.trace_start"() <{level = 10 : i32, message = "blm,bmd->bld"}> : () -> ()
    %cst_14 = arith.constant dense<0.000000e+00> : vector<2x16x32xf32>
    %29 = tpu.matmul %28, %16, %cst_14 {dimension_numbers = #tpu.dot_dimension_numbers<[2], [1], [1], [2], [0, 0, 0, 1, 1, 2], [0], [0]>} : vector<2x16x16xbf16>, vector<2x16x32xbf16>, vector<2x16x32xf32> -> vector<2x16x32xf32>
    "tpu.trace_stop"() : () -> ()
    %30 = vector.shape_cast %29 : vector<2x16x32xf32> to vector<32x32xf32>
    %31 = arith.truncf %30 : vector<32x32xf32> to vector<32x32xbf16>
    %c0_15 = arith.constant 0 : index
    %c0_16 = arith.constant 0 : index
    %32 = vector.load %arg6[%c0_15, %c0_16] : memref<32x32xbf16, #tpu.memory_space<vmem>>, vector<32x32xbf16>
    %cst_17 = arith.constant dense<0.000000e+00> : vector<32x32xf32>
    %33 = tpu.matmul %31, %32, %cst_17 {dimension_numbers = #tpu.dot_dimension_numbers<[1], [0], [0], [1], [0, 0, 1, 1], [], []>} : vector<32x32xbf16>, vector<32x32xbf16>, vector<32x32xf32> -> vector<32x32xf32>
    %34 = arith.addf %1, %33 : vector<32x32xf32>
    %c0_18 = arith.constant 0 : index
    %c0_19 = arith.constant 0 : index
    %35 = vector.load %arg2[%c0_18, %c0_19] : memref<16x16xf32, #tpu.memory_space<vmem>>, vector<16x16xf32>
    %36 = vector.shape_cast %35 : vector<16x16xf32> to vector<1x16x16xf32>
    %37 = vector.broadcast %36 : vector<1x16x16xf32> to vector<2x16x16xf32>
    %38 = vector.shape_cast %34 : vector<32x32xf32> to vector<2x16x32xf32>
    "tpu.trace_start"() <{level = 10 : i32, message = "blm,bmd->bld"}> : () -> ()
    %cst_20 = arith.constant dense<0.000000e+00> : vector<2x16x32xf32>
    %39 = tpu.matmul %37, %38, %cst_20 {dimension_numbers = #tpu.dot_dimension_numbers<[2], [1], [1], [2], [0, 0, 0, 1, 1, 2], [0], [0]>} : vector<2x16x16xf32>, vector<2x16x32xf32>, vector<2x16x32xf32> -> vector<2x16x32xf32>
    "tpu.trace_stop"() : () -> ()
    %40 = arith.subf %38, %39 : vector<2x16x32xf32>
    %41 = vector.shape_cast %40 : vector<2x16x32xf32> to vector<32x32xf32>
    %42 = arith.truncf %41 : vector<32x32xf32> to vector<32x32xbf16>
    %cst_21 = arith.constant 0.000000e+00 : f32
    %43 = vector.broadcast %cst_21 : f32 to vector<32x32xf32>
    %c0_i32 = arith.constant 0 : i32
    %44 = arith.index_cast %c0_i32 : i32 to index
    %c0_22 = arith.constant 0 : index
    %c0_23 = arith.constant 0 : index
    %45 = vector.load %arg7[%44, %c0_22, %c0_23] : memref<2x32x128xbf16, #tpu.memory_space<vmem>>, vector<1x32x128xbf16>
    %46 = vector.shape_cast %45 : vector<1x32x128xbf16> to vector<32x128xbf16>
    %47 = arith.index_cast %c0_i32 : i32 to index
    %c0_24 = arith.constant 0 : index
    %c0_25 = arith.constant 0 : index
    %48 = vector.load %arg8[%47, %c0_24, %c0_25] : memref<2x128x32xbf16, #tpu.memory_space<vmem>>, vector<1x128x32xbf16>
    %49 = vector.shape_cast %48 : vector<1x128x32xbf16> to vector<128x32xbf16>
    %cst_26 = arith.constant dense<0.000000e+00> : vector<32x128xf32>
    %50 = tpu.matmul %42, %46, %cst_26 {dimension_numbers = #tpu.dot_dimension_numbers<[1], [0], [0], [1], [0, 0, 1, 1], [], []>} : vector<32x32xbf16>, vector<32x128xbf16>, vector<32x128xf32> -> vector<32x128xf32>
    %cst_27 = arith.constant 0.000000e+00 : f32
    %51 = vector.broadcast %cst_27 : f32 to vector<32x128xf32>
    %52 = arith.maximumf %50, %51 : vector<32x128xf32>
    %53 = arith.truncf %52 : vector<32x128xf32> to vector<32x128xbf16>
    %cst_28 = arith.constant dense<0.000000e+00> : vector<32x32xf32>
    %54 = tpu.matmul %53, %49, %cst_28 {dimension_numbers = #tpu.dot_dimension_numbers<[1], [0], [0], [1], [0, 0, 1, 1], [], []>} : vector<32x128xbf16>, vector<128x32xbf16>, vector<32x32xf32> -> vector<32x32xf32>
    %55 = arith.addf %43, %54 : vector<32x32xf32>
    %c1_i32 = arith.constant 1 : i32
    %56 = arith.index_cast %c1_i32 : i32 to index
    %c0_29 = arith.constant 0 : index
    %c0_30 = arith.constant 0 : index
    %57 = vector.load %arg7[%56, %c0_29, %c0_30] : memref<2x32x128xbf16, #tpu.memory_space<vmem>>, vector<1x32x128xbf16>
    %58 = vector.shape_cast %57 : vector<1x32x128xbf16> to vector<32x128xbf16>
    %59 = arith.index_cast %c1_i32 : i32 to index
    %c0_31 = arith.constant 0 : index
    %c0_32 = arith.constant 0 : index
    %60 = vector.load %arg8[%59, %c0_31, %c0_32] : memref<2x128x32xbf16, #tpu.memory_space<vmem>>, vector<1x128x32xbf16>
    %61 = vector.shape_cast %60 : vector<1x128x32xbf16> to vector<128x32xbf16>
    %cst_33 = arith.constant dense<0.000000e+00> : vector<32x128xf32>
    %62 = tpu.matmul %42, %58, %cst_33 {dimension_numbers = #tpu.dot_dimension_numbers<[1], [0], [0], [1], [0, 0, 1, 1], [], []>} : vector<32x32xbf16>, vector<32x128xbf16>, vector<32x128xf32> -> vector<32x128xf32>
    %cst_34 = arith.constant 0.000000e+00 : f32
    %63 = vector.broadcast %cst_34 : f32 to vector<32x128xf32>
    %64 = arith.maximumf %62, %63 : vector<32x128xf32>
    %65 = arith.truncf %64 : vector<32x128xf32> to vector<32x128xbf16>
    %cst_35 = arith.constant dense<0.000000e+00> : vector<32x32xf32>
    %66 = tpu.matmul %65, %61, %cst_35 {dimension_numbers = #tpu.dot_dimension_numbers<[1], [0], [0], [1], [0, 0, 1, 1], [], []>} : vector<32x128xbf16>, vector<128x32xbf16>, vector<32x32xf32> -> vector<32x32xf32>
    %67 = arith.addf %55, %66 : vector<32x32xf32>
    %c2_i32 = arith.constant 2 : i32
    %68 = arith.addf %67, %41 : vector<32x32xf32>
    %69 = vector.shape_cast %68 : vector<32x32xf32> to vector<2x16x32xf32>
    "tpu.trace_start"() <{level = 10 : i32, message = "blm,bmd->bld"}> : () -> ()
    %cst_36 = arith.constant dense<0.000000e+00> : vector<2x16x32xf32>
    %70 = tpu.matmul %37, %69, %cst_36 {dimension_numbers = #tpu.dot_dimension_numbers<[2], [1], [1], [2], [0, 0, 0, 1, 1, 2], [0], [0]>} : vector<2x16x16xf32>, vector<2x16x32xf32>, vector<2x16x32xf32> -> vector<2x16x32xf32>
    "tpu.trace_stop"() : () -> ()
    %71 = arith.subf %69, %70 : vector<2x16x32xf32>
    %c0_37 = arith.constant 0 : index
    %c0_38 = arith.constant 0 : index
    %c0_39 = arith.constant 0 : index
    %72 = vector.load %arg9[%c0_37, %c0_38, %c0_39] : memref<2x16x32xf32, #tpu.memory_space<vmem>>, vector<2x16x32xf32>
    tpu.vector_store %arg9[%c0_37, %c0_38, %c0_39], %71 {strides = array<i32>} : memref<2x16x32xf32, #tpu.memory_space<vmem>>, vector<2x16x32xf32>,
    %c0_40 = arith.constant 0 : index
    %c0_41 = arith.constant 0 : index
    %c0_42 = arith.constant 0 : index
    %73 = vector.load %arg10[%c0_40, %c0_41, %c0_42] : memref<2x16x16xf32, #tpu.memory_space<vmem>>, vector<2x16x16xf32>
    tpu.vector_store %arg10[%c0_40, %c0_41, %c0_42], %27 {strides = array<i32>} : memref<2x16x16xf32, #tpu.memory_space<vmem>>, vector<2x16x16xf32>,
    return
  }
  func.func @transform_0(%arg0: i32) -> (i32, i32, i32) {
    %c0_i32 = arith.constant 0 : i32
    %c0_i32_0 = arith.constant 0 : i32
    %c0_i32_1 = arith.constant 0 : i32
    return %arg0, %c0_i32, %c0_i32_0 : i32, i32, i32
  }
  func.func @transform_1(%arg0: i32) -> (i32, i32) {
    %c0_i32 = arith.constant 0 : i32
    %c0_i32_0 = arith.constant 0 : i32
    %c0_i32_1 = arith.constant 0 : i32
    return %c0_i32, %c0_i32_0 : i32, i32
  }
  func.func @transform_2(%arg0: i32) -> (i32, i32) {
    %c0_i32 = arith.constant 0 : i32
    %c0_i32_0 = arith.constant 0 : i32
    %c0_i32_1 = arith.constant 0 : i32
    return %c0_i32, %c0_i32_0 : i32, i32
  }
  func.func @transform_3(%arg0: i32) -> (i32, i32) {
    %c0_i32 = arith.constant 0 : i32
    %c0_i32_0 = arith.constant 0 : i32
    %c0_i32_1 = arith.constant 0 : i32
    return %c0_i32, %c0_i32_0 : i32, i32
  }
  func.func @transform_4(%arg0: i32) -> (i32, i32) {
    %c0_i32 = arith.constant 0 : i32
    %c0_i32_0 = arith.constant 0 : i32
    %c0_i32_1 = arith.constant 0 : i32
    return %c0_i32, %c0_i32_0 : i32, i32
  }
  func.func @transform_5(%arg0: i32) -> (i32, i32) {
    %c0_i32 = arith.constant 0 : i32
    %c0_i32_0 = arith.constant 0 : i32
    %c0_i32_1 = arith.constant 0 : i32
    return %c0_i32, %c0_i32_0 : i32, i32
  }
  func.func @transform_6(%arg0: i32) -> (i32, i32, i32) {
    %c0_i32 = arith.constant 0 : i32
    %c0_i32_0 = arith.constant 0 : i32
    %c0_i32_1 = arith.constant 0 : i32
    %c0_i32_2 = arith.constant 0 : i32
    return %c0_i32, %c0_i32_0, %c0_i32_1 : i32, i32, i32
  }
  func.func @transform_7(%arg0: i32) -> (i32, i32, i32) {
    %c0_i32 = arith.constant 0 : i32
    %c0_i32_0 = arith.constant 0 : i32
    %c0_i32_1 = arith.constant 0 : i32
    %c0_i32_2 = arith.constant 0 : i32
    return %c0_i32, %c0_i32_0, %c0_i32_1 : i32, i32, i32
  }
  func.func @transform_8(%arg0: i32) -> (i32, i32, i32) {
    %c0_i32 = arith.constant 0 : i32
    %c0_i32_0 = arith.constant 0 : i32
    %c0_i32_1 = arith.constant 0 : i32
    return %arg0, %c0_i32, %c0_i32_0 : i32, i32, i32
  }
  func.func @transform_9(%arg0: i32) -> (i32, i32, i32) {
    %c0_i32 = arith.constant 0 : i32
    %c0_i32_0 = arith.constant 0 : i32
    %c0_i32_1 = arith.constant 0 : i32
    return %arg0, %c0_i32, %c0_i32_0 : i32, i32, i32
  }
}

</mosaic_0001>

<llo_original>
// kernel: forward.1
$region0: #{forward.1}
  #allocation0 [shape = 'u32[]', space=smem, size = 0x4, offset = 0x4, fixed_abs, tag = 'smem constant byte address 0x4 - core index']
  #allocation1 [shape = 'u32[144,128]{1,0:T(1,128)}', space=vmem, size = 0x12000, scoped, tag = 'internal scratch']
  %s0 = inlined_call_operand.vmem [shape: f32[4,16,32], index: 0, kind: input, shape index: {}]
  %s1 = inlined_call_operand.vmem [shape: f32[16,16], index: 1, kind: input, shape index: {}]
  %s2 = inlined_call_operand.vmem [shape: bf16[32,32], index: 2, kind: input, shape index: {}]
  %s3 = inlined_call_operand.vmem [shape: bf16[32,32], index: 3, kind: input, shape index: {}]
  %s4 = inlined_call_operand.vmem [shape: bf16[32,32], index: 4, kind: input, shape index: {}]
  %s5 = inlined_call_operand.vmem [shape: bf16[32,32], index: 5, kind: input, shape index: {}]
  %s6 = inlined_call_operand.vmem [shape: bf16[2,32,128], index: 6, kind: input, shape index: {}]
  %s7 = inlined_call_operand.vmem [shape: bf16[2,128,32], index: 7, kind: input, shape index: {}]
  %s8 = inlined_call_operand.hbm [shape: f32[4,16,32], index: 8, kind: output, shape index: {0}]
  %s9 = inlined_call_operand.hbm [shape: f32[4,16,16], index: 9, kind: output, shape index: {1}]
  %10 = xla_tuple %s8, %s9
  %s11 = sld [smem:[#allocation0]]
  $region73: #{forward.1} parent=0
    _
  %s13 = ssub.s32 1, %s11
  %s14 = scalar_select 0, %s13, %s11
  $region1: #{forward.1} parent=0
    #allocation2 [shape = 'u8[32768]{0}', space=vmem, size = 0x8000, scoped, tag = 'output window, operand 0']
    #allocation3 [shape = 's32[2]{0}', space=sflag, size = 0x8, scoped, tag = 'scoped memory for forward.1']
    #allocation4 [shape = 'u8[32768]{0}', space=vmem, size = 0x8000, scoped, tag = 'output window, operand 1']
    #allocation5 [shape = 's32[2]{0}', space=sflag, size = 0x8, scoped, tag = 'scoped memory for forward.1']
    %15 = vsyncpa [#allocation3], 0
    %s16 = scalar_lea.sflag [#allocation3], 1
    %17 = vsyncpa %s16, 0
    %18 = vsyncpa [#allocation5], 0
    %s19 = scalar_lea.sflag [#allocation5], 1
    %20 = vsyncpa %s19, 0
    loop: start=0, step=1, limit=4
    $region2: #{forward.1} parent=1 // loop_pre_header
      _
    $region3: #{forward.1} parent=1 // loop_header
      %s22 = sphi 0, %s26
      %p23 = scmp.ge.s32.totalorder %s22, 4
      %s32 = sphi 0, %s34
      %s35 = sphi 0, %s32
      %s36 = sphi 0, %s35
      %s52 = sphi 0, %s36
      %s56 = sphi 0, %s56
      %s58 = sphi 0, %s56
      %s59 = sphi 0, %s58
      %s73 = sphi 0, %s59
      %s77 = sphi 0, %s77
      %s79 = sphi 0, %s77
      %s80 = sphi 0, %s79
      %s94 = sphi 0, %s80
      %s98 = sphi 0, %s98
      %s100 = sphi 0, %s98
      %s101 = sphi 0, %s100
      %s115 = sphi 0, %s101
      %s119 = sphi 0, %s119
      %s121 = sphi 0, %s119
      %s122 = sphi 0, %s121
      %s136 = sphi 0, %s122
      %s140 = sphi 0, %s140
      %s142 = sphi 0, %s140
      %s143 = sphi 0, %s142
      %s157 = sphi 0, %s143
      %s161 = sphi 0, %s161
      %s163 = sphi 0, %s161
      %s164 = sphi 0, %s163
      %s178 = sphi 0, %s164
      %s182 = sphi 0, %s182
      %s184 = sphi 0, %s182
      %s185 = sphi 0, %s184
      %s199 = sphi 0, %s185
      %s205 = sphi 0, %s207
      %s208 = sphi 0, %s205
      %s209 = sphi 0, %s208
      %s225 = sphi 0, %s209
      %s231 = sphi 0, %s233
      %s234 = sphi 0, %s231
      %s235 = sphi 0, %s234
      %s251 = sphi 0, %s235
    $region4: #{forward.1} parent=1 // loop_header_branch
      %25 = sbr.rel (%p23) target = $region8
    $region5: #{forward.1} parent=1 // loop_body
      %s27 = ssub.s32 %s22, 1
      %s28 = ssub.s32 %s22, 2
      %s29 = sadd.s32 %s22, 1
      %s30 = ssub.s32 %s22, %s29
      %p31 = scmp.eq.s32.totalorder %s30, 0
      %s33 = sadd.s32 %s32, 1
      %s34 = scalar_select %p31, %s32, %s33
      %p37 = pneg %p31
      %p38 = scmp.eq.s32.totalorder %s22, 1
      %p39 = por %p37, %p38
      %p40 = scmp.ne.s32.totalorder %s32, %s35
      %p41 = scmp.eq.s32.totalorder %s22, 0
      %p42 = por %p40, %p41
      %p43 = scmp.ne.s32.totalorder %s32, %s35
      %p44 = scmp.eq.s32.totalorder %s27, 1
      %p45 = por %p43, %p44
      %p46 = scmp.ne.s32.totalorder %s35, %s36
      %p47 = scmp.eq.s32.totalorder %s27, 0
      %p48 = por %p46, %p47
      %p49 = scmp.ne.s32.totalorder %s35, %s36
      %p50 = scmp.eq.s32.totalorder %s28, 1
      %p51 = por %p49, %p50
      %p53 = scmp.ne.s32.totalorder %s36, %s52
      %p54 = scmp.eq.s32.totalorder %s28, 0
      %p55 = por %p53, %p54
      %s57 = sadd.s32 %s56, 1
      %p60 = scmp.eq.s32.totalorder %s22, 1
      %p61 = scmp.ne.s32.totalorder %s56, %s58
      %p62 = scmp.eq.s32.totalorder %s22, 0
      %p63 = por %p61, %p62
      %p64 = scmp.ne.s32.totalorder %s56, %s58
      %p65 = scmp.eq.s32.totalorder %s27, 1
      %p66 = por %p64, %p65
      %p67 = scmp.ne.s32.totalorder %s58, %s59
      %p68 = scmp.eq.s32.totalorder %s27, 0
      %p69 = por %p67, %p68
      %p70 = scmp.ne.s32.totalorder %s58, %s59
      %p71 = scmp.eq.s32.totalorder %s28, 1
      %p72 = por %p70, %p71
      %p74 = scmp.ne.s32.totalorder %s59, %s73
      %p75 = scmp.eq.s32.totalorder %s28, 0
      %p76 = por %p74, %p75
      %s78 = sadd.s32 %s77, 1
      %p81 = scmp.eq.s32.totalorder %s22, 1
      %p82 = scmp.ne.s32.totalorder %s77, %s79
      %p83 = scmp.eq.s32.totalorder %s22, 0
      %p84 = por %p82, %p83
      %p85 = scmp.ne.s32.totalorder %s77, %s79
      %p86 = scmp.eq.s32.totalorder %s27, 1
      %p87 = por %p85, %p86
      %p88 = scmp.ne.s32.totalorder %s79, %s80
      %p89 = scmp.eq.s32.totalorder %s27, 0
      %p90 = por %p88, %p89
      %p91 = scmp.ne.s32.totalorder %s79, %s80
      %p92 = scmp.eq.s32.totalorder %s28, 1
      %p93 = por %p91, %p92
      %p95 = scmp.ne.s32.totalorder %s80, %s94
      %p96 = scmp.eq.s32.totalorder %s28, 0
      %p97 = por %p95, %p96
      %s99 = sadd.s32 %s98, 1
      %p102 = scmp.eq.s32.totalorder %s22, 1
      %p103 = scmp.ne.s32.totalorder %s98, %s100
      %p104 = scmp.eq.s32.totalorder %s22, 0
      %p105 = por %p103, %p104
      %p106 = scmp.ne.s32.totalorder %s98, %s100
      %p107 = scmp.eq.s32.totalorder %s27, 1
      %p108 = por %p106, %p107
      %p109 = scmp.ne.s32.totalorder %s100, %s101
      %p110 = scmp.eq.s32.totalorder %s27, 0
      %p111 = por %p109, %p110
      %p112 = scmp.ne.s32.totalorder %s100, %s101
      %p113 = scmp.eq.s32.totalorder %s28, 1
      %p114 = por %p112, %p113
      %p116 = scmp.ne.s32.totalorder %s101, %s115
      %p117 = scmp.eq.s32.totalorder %s28, 0
      %p118 = por %p116, %p117
      %s120 = sadd.s32 %s119, 1
      %p123 = scmp.eq.s32.totalorder %s22, 1
      %p124 = scmp.ne.s32.totalorder %s119, %s121
      %p125 = scmp.eq.s32.totalorder %s22, 0
      %p126 = por %p124, %p125
      %p127 = scmp.ne.s32.totalorder %s119, %s121
      %p128 = scmp.eq.s32.totalorder %s27, 1
      %p129 = por %p127, %p128
      %p130 = scmp.ne.s32.totalorder %s121, %s122
      %p131 = scmp.eq.s32.totalorder %s27, 0
      %p132 = por %p130, %p131
      %p133 = scmp.ne.s32.totalorder %s121, %s122
      %p134 = scmp.eq.s32.totalorder %s28, 1
      %p135 = por %p133, %p134
      %p137 = scmp.ne.s32.totalorder %s122, %s136
      %p138 = scmp.eq.s32.totalorder %s28, 0
      %p139 = por %p137, %p138
      %s141 = sadd.s32 %s140, 1
      %p144 = scmp.eq.s32.totalorder %s22, 1
      %p145 = scmp.ne.s32.totalorder %s140, %s142
      %p146 = scmp.eq.s32.totalorder %s22, 0
      %p147 = por %p145, %p146
      %p148 = scmp.ne.s32.totalorder %s140, %s142
      %p149 = scmp.eq.s32.totalorder %s27, 1
      %p150 = por %p148, %p149
      %p151 = scmp.ne.s32.totalorder %s142, %s143
      %p152 = scmp.eq.s32.totalorder %s27, 0
      %p153 = por %p151, %p152
      %p154 = scmp.ne.s32.totalorder %s142, %s143
      %p155 = scmp.eq.s32.totalorder %s28, 1
      %p156 = por %p154, %p155
      %p158 = scmp.ne.s32.totalorder %s143, %s157
      %p159 = scmp.eq.s32.totalorder %s28, 0
      %p160 = por %p158, %p159
      %s162 = sadd.s32 %s161, 1
      %p165 = scmp.eq.s32.totalorder %s22, 1
      %p166 = scmp.ne.s32.totalorder %s161, %s163
      %p167 = scmp.eq.s32.totalorder %s22, 0
      %p168 = por %p166, %p167
      %p169 = scmp.ne.s32.totalorder %s161, %s163
      %p170 = scmp.eq.s32.totalorder %s27, 1
      %p171 = por %p169, %p170
      %p172 = scmp.ne.s32.totalorder %s163, %s164
      %p173 = scmp.eq.s32.totalorder %s27, 0
      %p174 = por %p172, %p173
      %p175 = scmp.ne.s32.totalorder %s163, %s164
      %p176 = scmp.eq.s32.totalorder %s28, 1
      %p177 = por %p175, %p176
      %p179 = scmp.ne.s32.totalorder %s164, %s178
      %p180 = scmp.eq.s32.totalorder %s28, 0
      %p181 = por %p179, %p180
      %s183 = sadd.s32 %s182, 1
      %p186 = scmp.eq.s32.totalorder %s22, 1
      %p187 = scmp.ne.s32.totalorder %s182, %s184
      %p188 = scmp.eq.s32.totalorder %s22, 0
      %p189 = por %p187, %p188
      %p190 = scmp.ne.s32.totalorder %s182, %s184
      %p191 = scmp.eq.s32.totalorder %s27, 1
      %p192 = por %p190, %p191
      %p193 = scmp.ne.s32.totalorder %s184, %s185
      %p194 = scmp.eq.s32.totalorder %s27, 0
      %p195 = por %p193, %p194
      %p196 = scmp.ne.s32.totalorder %s184, %s185
      %p197 = scmp.eq.s32.totalorder %s28, 1
      %p198 = por %p196, %p197
      %p200 = scmp.ne.s32.totalorder %s185, %s199
      %p201 = scmp.eq.s32.totalorder %s28, 0
      %p202 = por %p200, %p201
      %s203 = ssub.s32 %s22, %s29
      %p204 = scmp.eq.s32.totalorder %s203, 0
      %s206 = sadd.s32 %s205, 1
      %s207 = scalar_select %p204, %s205, %s206
      %p210 = pneg %p204
      %p211 = scmp.eq.s32.totalorder %s22, 1
      %p212 = por %p210, %p211
      %p213 = scmp.ne.s32.totalorder %s205, %s208
      %p214 = scmp.eq.s32.totalorder %s22, 0
      %p215 = por %p213, %p214
      %p216 = scmp.ne.s32.totalorder %s205, %s208
      %p217 = scmp.eq.s32.totalorder %s27, 1
      %p218 = por %p216, %p217
      %p219 = scmp.ne.s32.totalorder %s208, %s209
      %p220 = scmp.eq.s32.totalorder %s27, 0
      %p221 = por %p219, %p220
      %p222 = scmp.ne.s32.totalorder %s208, %s209
      %p223 = scmp.eq.s32.totalorder %s28, 1
      %p224 = por %p222, %p223
      %p226 = scmp.ne.s32.totalorder %s209, %s225
      %p227 = scmp.eq.s32.totalorder %s28, 0
      %p228 = por %p226, %p227
      %s229 = ssub.s32 %s22, %s29
      %p230 = scmp.eq.s32.totalorder %s229, 0
      %s232 = sadd.s32 %s231, 1
      %s233 = scalar_select %p230, %s231, %s232
      %p236 = pneg %p230
      %p237 = scmp.eq.s32.totalorder %s22, 1
      %p238 = por %p236, %p237
      %p239 = scmp.ne.s32.totalorder %s231, %s234
      %p240 = scmp.eq.s32.totalorder %s22, 0
      %p241 = por %p239, %p240
      %p242 = scmp.ne.s32.totalorder %s231, %s234
      %p243 = scmp.eq.s32.totalorder %s27, 1
      %p244 = por %p242, %p243
      %p245 = scmp.ne.s32.totalorder %s234, %s235
      %p246 = scmp.eq.s32.totalorder %s27, 0
      %p247 = por %p245, %p246
      %p248 = scmp.ne.s32.totalorder %s234, %s235
      %p249 = scmp.eq.s32.totalorder %s28, 1
      %p250 = por %p248, %p249
      %p252 = scmp.ne.s32.totalorder %s235, %s251
      %p253 = scmp.eq.s32.totalorder %s28, 0
      %p254 = por %p252, %p253
      %p255 = scmp.le.s32.totalorder 1, %s22
      %p256 = scmp.lt.s32.totalorder %s22, 3
      %p257 = pnand %p255, %p256
      %p258 = pneg %p257
      // Predicated region
      $region9: #{forward.1} parent=5 // pred_check
        _
      $region10: #{forward.1} parent=5 // pred_check_branch
        %260 = sbr.rel (%p257) target = $region12
      $region11: #{forward.1} parent=5 // pred_region
        %s261 = ssub.s32 %s22, 1
        // Predicated region
        $region13: #{forward.1} parent=11 // pred_check
          %p262 = pneg %p69
        $region14: #{forward.1} parent=11 // pred_check_branch
          %264 = sbr.rel (%p262) target = $region16
        $region15: #{forward.1} parent=11 // pred_region
          _
        $region16: #{forward.1} parent=11 // pred_fallthru
          _
        // Predicated region
        $region17: #{forward.1} parent=11 // pred_check
          %p265 = pneg %p90
        $region18: #{forward.1} parent=11 // pred_check_branch
          %267 = sbr.rel (%p265) target = $region20
        $region19: #{forward.1} parent=11 // pred_region
          _
        $region20: #{forward.1} parent=11 // pred_fallthru
          _
        // Predicated region
        $region21: #{forward.1} parent=11 // pred_check
          %p268 = pneg %p111
        $region22: #{forward.1} parent=11 // pred_check_branch
          %270 = sbr.rel (%p268) target = $region24
        $region23: #{forward.1} parent=11 // pred_region
          _
        $region24: #{forward.1} parent=11 // pred_fallthru
          _
        // Predicated region
        $region25: #{forward.1} parent=11 // pred_check
          %p271 = pneg %p132
        $region26: #{forward.1} parent=11 // pred_check_branch
          %273 = sbr.rel (%p271) target = $region28
        $region27: #{forward.1} parent=11 // pred_region
          _
        $region28: #{forward.1} parent=11 // pred_fallthru
          _
        // Predicated region
        $region29: #{forward.1} parent=11 // pred_check
          %p274 = pneg %p153
        $region30: #{forward.1} parent=11 // pred_check_branch
          %276 = sbr.rel (%p274) target = $region32
        $region31: #{forward.1} parent=11 // pred_region
          _
        $region32: #{forward.1} parent=11 // pred_fallthru
          _
        // Predicated region
        $region33: #{forward.1} parent=11 // pred_check
          %p277 = pneg %p174
        $region34: #{forward.1} parent=11 // pred_check_branch
          %279 = sbr.rel (%p277) target = $region36
        $region35: #{forward.1} parent=11 // pred_region
          _
        $region36: #{forward.1} parent=11 // pred_fallthru
          _
        // Predicated region
        $region37: #{forward.1} parent=11 // pred_check
          %p280 = pneg %p195
        $region38: #{forward.1} parent=11 // pred_check_branch
          %282 = sbr.rel (%p280) target = $region40
        $region39: #{forward.1} parent=11 // pred_region
          _
        $region40: #{forward.1} parent=11 // pred_fallthru
          _
      $region12: #{forward.1} parent=5 // pred_fallthru
        _
      %p283 = scmp.lt.s32.totalorder %s22, 2
      // Predicated region
      $region41: #{forward.1} parent=5 // pred_check
        %p284 = pneg %p283
      $region42: #{forward.1} parent=5 // pred_check_branch
        %286 = sbr.rel (%p284) target = $region44
      $region43: #{forward.1} parent=5 // pred_region
        // Predicated region
        $region45: #{forward.1} parent=43 // pred_check
          %p287 = pneg %p42
        $region46: #{forward.1} parent=43 // pred_check_branch
          %289 = sbr.rel (%p287) target = $region48
        $region47: #{forward.1} parent=43 // pred_region
          %s290 = smul.u32 2, %s22
          %p291 = scmp.lt.s32.totalorder %s290, 3
          %s292 = scalar_select %p291, %s290, 3
          %s293 = smul.addr %s292, 2
          %s294 = smul.addr %s293, 8
          %s295 = scalar_lea.vmem %s0, %s294
          %s296 = smul.u32 2, %s22
        $region48: #{forward.1} parent=43 // pred_fallthru
          _
      $region44: #{forward.1} parent=5 // pred_fallthru
        _
      %p297 = scmp.le.s32.totalorder 1, %s22
      %p298 = scmp.lt.s32.totalorder %s22, 3
      %p299 = pnand %p297, %p298
      %p300 = pneg %p299
      // Predicated region
      $region49: #{forward.1} parent=5 // pred_check
        _
      $region50: #{forward.1} parent=5 // pred_check_branch
        %302 = sbr.rel (%p299) target = $region52
      $region51: #{forward.1} parent=5 // pred_region
        %s303 = ssub.s32 %s22, 1
        %s304 = smul.u32 2, %s27
        %p305 = scmp.lt.s32.totalorder %s304, 3
        %s306 = scalar_select %p305, %s304, 3
        %s307 = smul.addr %s306, 2
        %s308 = smul.addr %s307, 8
        %s309 = scalar_lea.vmem %s0, %s308
        %p310 = pneg %p48
        %p311 = pneg %p45
        %p312 = pneg %p69
        %p313 = pneg %p66
        %p314 = pneg %p90
        %p315 = pneg %p87
        %p316 = pneg %p111
        %p317 = pneg %p108
        %p318 = pneg %p132
        %p319 = pneg %p129
        %p320 = pneg %p153
        %p321 = pneg %p150
        %p322 = pneg %p174
        %p323 = pneg %p171
        %p324 = pneg %p195
        %p325 = pneg %p192
        %p326 = pneg %p221
        %p327 = pneg %p218
        %s328 = sand.u32 %s208, 1
        %s329 = scalar_lea.sflag [#allocation3], %s328
        %s330 = sand.u32 %s208, 1
        %s331 = smul.addr %s330, 32
        %s332 = scalar_lea.vmem [#allocation2], %s331
        %p333 = pneg %p247
        %p334 = pneg %p244
        %s335 = sand.u32 %s234, 1
        %s336 = scalar_lea.sflag [#allocation5], %s335
        %s337 = sand.u32 %s234, 1
        %s338 = smul.addr %s337, 32
        %s339 = scalar_lea.vmem [#allocation4], %s338
        %s340 = smul.u32 2, %s27
        %p341 = scmp.lt.s32.totalorder %s340, 3
        %s342 = scalar_select %p341, %s340, 3
        %s343 = smul.addr %s342, 2
        %s344 = smul.addr %s343, 8
        %s345 = scalar_lea.vmem %s0, %s344
        %s346 = smul.u32 2, %s27
        %s347 = smul.u32 2, %s27
        %s348 = smul.u32 2, %s27
        %v350 = vld [vmem:[%s345] sm:$0xff]
        %v351 = vld [vmem:[%s345 + $0x8] sm:$0xff]
        %v352 = vld [vmem:[%s345 + $0x10] sm:$0xff]
        %v353 = vld [vmem:[%s345 + $0x18] sm:$0xff]
        %v354 = vpack.c.bf16 %v351, %v350
        %v355 = vpack.c.bf16 %v353, %v352
        %v356 = vld [vmem:[%s2] sm:$0xf]
        %v357 = vld [vmem:[%s2 + $0x4] sm:$0xf]
        %v358 = vld [vmem:[%s2 + $0x8] sm:$0xf]
        %v359 = vld [vmem:[%s2 + $0xc] sm:$0xf]
        %v364 = vunpack.c.l.b16 %v356
        %v365 = vunpack.c.l.b16 %v357
        %v366 = vunpack.c.l.b16 %v358
        %v367 = vunpack.c.l.b16 %v359
        %v368 = vpack.c.b16 %v365, %v364
        %v369 = vpack.c.b16 %v367, %v366
        %vm372 = vcmask 261120
        %v374 = vsel %vm372, %v354, 0
        %v377 = vsel %vm372, %v355, 0
        %379 = vmatprep.subr.bf16.mxu0 0
        %380 = vmatpush1.bf16.msra.mxu0 0
        %381 = vmatprep.subr.bf16.mxu0 0
        %382 = vmatpush1.bf16.msra.mxu0 0
        %383 = vmatprep.subr.bf16.mxu0 0
        %384 = vmatpush1.bf16.msra.mxu0 0
        %385 = vmatprep.subr.bf16.mxu0 0
        %386 = vmatpush1.bf16.msra.mxu0 0
        %387 = vmatprep.subr.bf16.mxu0 0
        %388 = vmatpush1.bf16.msra.mxu0 0
        %389 = vmatprep.subr.bf16.mxu0 0
        %390 = vmatpush1.bf16.msra.mxu0 0
        %391 = vmatprep.subr.bf16.mxu0 0
        %392 = vmatpush1.bf16.msra.mxu0 %v369
        %393 = vmatprep.subr.bf16.mxu0 0
        %394 = vmatpush1.bf16.msra.mxu0 %v368
        %395 = vmatprep.subr.bf16.mxu0 0
        %396 = vmatpush2.bf16.msra.mxu0 0
        %397 = vmatprep.subr.bf16.mxu0 0
        %398 = vmatpush2.bf16.msra.mxu0 0
        %399 = vmatprep.subr.bf16.mxu0 0
        %400 = vmatpush2.bf16.msra.mxu0 0
        %401 = vmatprep.subr.bf16.mxu0 0
        %402 = vmatpush2.bf16.msra.mxu0 0
        %403 = vmatprep.subr.bf16.mxu0 0
        %404 = vmatpush2.bf16.msra.mxu0 0
        %405 = vmatprep.subr.bf16.mxu0 0
        %406 = vmatpush2.bf16.msra.mxu0 0
        %407 = vmatprep.subr.bf16.mxu0 0
        %408 = vmatpush2.bf16.msra.mxu0 0
        %409 = vmatprep.subr.bf16.mxu0 0
        %410 = vmatpush2.bf16.msra.mxu0 0
        %411 = vmatprep.mubr.bf16.mxu0 0
        %412 = vmatmul.mubr.bf16.gmra.mxu0 %v374
        %v413 = vpop.f32.mrf.mxu0
        %v414 = vadd.f32 0.0, %v413
        %v415 = vpop.f32.mrf.mxu0
        %v416 = vpop.f32.mrf.mxu0
        %v417 = vadd.f32 0.0, %v416
        %v418 = vpop.f32.mrf.mxu0
        %419 = vmatprep.mubr.bf16.mxu0 0
        %420 = vmatmul.mubr.bf16.gmra.mxu0 %v377
        %v421 = vpop.f32.mrf.mxu0
        %v422 = vadd.f32 0.0, %v421
        %v423 = vpop.f32.mrf.mxu0
        %v424 = vpop.f32.mrf.mxu0
        %v425 = vadd.f32 0.0, %v424
        %v426 = vpop.f32.mrf.mxu0
        %427 = vdwg.mxu0
        %v428 = vmul.f32 %v414, 0.17677669
        %v429 = vmul.f32 %v417, 0.17677669
        %v430 = vmul.f32 %v422, 0.17677669
        %v431 = vmul.f32 %v425, 0.17677669
        %v432 = vld [vmem:[%s3] sm:$0xf]
        %v433 = vld [vmem:[%s3 + $0x4] sm:$0xf]
        %v434 = vld [vmem:[%s3 + $0x8] sm:$0xf]
        %v435 = vld [vmem:[%s3 + $0xc] sm:$0xf]
        %v440 = vunpack.c.l.b16 %v432
        %v441 = vunpack.c.l.b16 %v433
        %v442 = vunpack.c.l.b16 %v434
        %v443 = vunpack.c.l.b16 %v435
        %v444 = vpack.c.b16 %v441, %v440
        %v445 = vpack.c.b16 %v443, %v442
        %448 = vmatprep.subr.bf16.mxu0 0
        %449 = vmatpush1.bf16.msra.mxu0 0
        %450 = vmatprep.subr.bf16.mxu0 0
        %451 = vmatpush1.bf16.msra.mxu0 0
        %452 = vmatprep.subr.bf16.mxu0 0
        %453 = vmatpush1.bf16.msra.mxu0 0
        %454 = vmatprep.subr.bf16.mxu0 0
        %455 = vmatpush1.bf16.msra.mxu0 0
        %456 = vmatprep.subr.bf16.mxu0 0
        %457 = vmatpush1.bf16.msra.mxu0 0
        %458 = vmatprep.subr.bf16.mxu0 0
        %459 = vmatpush1.bf16.msra.mxu0 0
        %460 = vmatprep.subr.bf16.mxu0 0
        %461 = vmatpush1.bf16.msra.mxu0 %v445
        %462 = vmatprep.subr.bf16.mxu0 0
        %463 = vmatpush1.bf16.msra.mxu0 %v444
        %464 = vmatprep.subr.bf16.mxu0 0
        %465 = vmatpush2.bf16.msra.mxu0 0
        %466 = vmatprep.subr.bf16.mxu0 0
        %467 = vmatpush2.bf16.msra.mxu0 0
        %468 = vmatprep.subr.bf16.mxu0 0
        %469 = vmatpush2.bf16.msra.mxu0 0
        %470 = vmatprep.subr.bf16.mxu0 0
        %471 = vmatpush2.bf16.msra.mxu0 0
        %472 = vmatprep.subr.bf16.mxu0 0
        %473 = vmatpush2.bf16.msra.mxu0 0
        %474 = vmatprep.subr.bf16.mxu0 0
        %475 = vmatpush2.bf16.msra.mxu0 0
        %476 = vmatprep.subr.bf16.mxu0 0
        %477 = vmatpush2.bf16.msra.mxu0 0
        %478 = vmatprep.subr.bf16.mxu0 0
        %479 = vmatpush2.bf16.msra.mxu0 0
        %480 = vmatprep.mubr.bf16.mxu0 0
        %481 = vmatmul.mubr.bf16.gmra.mxu0 %v374
        %v482 = vpop.f32.mrf.mxu0
        %v483 = vadd.f32 0.0, %v482
        %v484 = vpop.f32.mrf.mxu0
        %v485 = vpop.f32.mrf.mxu0
        %v486 = vadd.f32 0.0, %v485
        %v487 = vpop.f32.mrf.mxu0
        %488 = vmatprep.mubr.bf16.mxu0 0
        %489 = vmatmul.mubr.bf16.gmra.mxu0 %v377
        %v490 = vpop.f32.mrf.mxu0
        %v491 = vadd.f32 0.0, %v490
        %v492 = vpop.f32.mrf.mxu0
        %v493 = vpop.f32.mrf.mxu0
        %v494 = vadd.f32 0.0, %v493
        %v495 = vpop.f32.mrf.mxu0
        %496 = vdwg.mxu0
        %v497 = vld [vmem:[%s4] sm:$0xf]
        %v498 = vld [vmem:[%s4 + $0x4] sm:$0xf]
        %v499 = vld [vmem:[%s4 + $0x8] sm:$0xf]
        %v500 = vld [vmem:[%s4 + $0xc] sm:$0xf]
        %v505 = vunpack.c.l.b16 %v497
        %v506 = vunpack.c.l.b16 %v498
        %v507 = vunpack.c.l.b16 %v499
        %v508 = vunpack.c.l.b16 %v500
        %v509 = vpack.c.b16 %v506, %v505
        %v510 = vpack.c.b16 %v508, %v507
        %513 = vmatprep.subr.bf16.mxu0 0
        %514 = vmatpush1.bf16.msra.mxu0 0
        %515 = vmatprep.subr.bf16.mxu0 0
        %516 = vmatpush1.bf16.msra.mxu0 0
        %517 = vmatprep.subr.bf16.mxu0 0
        %518 = vmatpush1.bf16.msra.mxu0 0
        %519 = vmatprep.subr.bf16.mxu0 0
        %520 = vmatpush1.bf16.msra.mxu0 0
        %521 = vmatprep.subr.bf16.mxu0 0
        %522 = vmatpush1.bf16.msra.mxu0 0
        %523 = vmatprep.subr.bf16.mxu0 0
        %524 = vmatpush1.bf16.msra.mxu0 0
        %525 = vmatprep.subr.bf16.mxu0 0
        %526 = vmatpush1.bf16.msra.mxu0 %v510
        %527 = vmatprep.subr.bf16.mxu0 0
        %528 = vmatpush1.bf16.msra.mxu0 %v509
        %529 = vmatprep.subr.bf16.mxu0 0
        %530 = vmatpush2.bf16.msra.mxu0 0
        %531 = vmatprep.subr.bf16.mxu0 0
        %532 = vmatpush2.bf16.msra.mxu0 0
        %533 = vmatprep.subr.bf16.mxu0 0
        %534 = vmatpush2.bf16.msra.mxu0 0
        %535 = vmatprep.subr.bf16.mxu0 0
        %536 = vmatpush2.bf16.msra.mxu0 0
        %537 = vmatprep.subr.bf16.mxu0 0
        %538 = vmatpush2.bf16.msra.mxu0 0
        %539 = vmatprep.subr.bf16.mxu0 0
        %540 = vmatpush2.bf16.msra.mxu0 0
        %541 = vmatprep.subr.bf16.mxu0 0
        %542 = vmatpush2.bf16.msra.mxu0 0
        %543 = vmatprep.subr.bf16.mxu0 0
        %544 = vmatpush2.bf16.msra.mxu0 0
        %545 = vmatprep.mubr.bf16.mxu0 0
        %546 = vmatmul.mubr.bf16.gmra.mxu0 %v374
        %v547 = vpop.f32.mrf.mxu0
        %v548 = vadd.f32 0.0, %v547
        %v549 = vpop.f32.mrf.mxu0
        %v550 = vpop.f32.mrf.mxu0
        %v551 = vadd.f32 0.0, %v550
        %v552 = vpop.f32.mrf.mxu0
        %553 = vmatprep.mubr.bf16.mxu0 0
        %554 = vmatmul.mubr.bf16.gmra.mxu0 %v377
        %v555 = vpop.f32.mrf.mxu0
        %v556 = vadd.f32 0.0, %v555
        %v557 = vpop.f32.mrf.mxu0
        %v558 = vpop.f32.mrf.mxu0
        %v559 = vadd.f32 0.0, %v558
        %v560 = vpop.f32.mrf.mxu0
        %561 = vdwg.mxu0
        %v562 = vpack.c.bf16 %v429, %v428
        %v563 = vpack.c.bf16 %v431, %v430
        %v564 = vpack.c.bf16 %v486, %v483
        %v565 = vpack.c.bf16 %v494, %v491
        %v566 = vpack.c.bf16 %v551, %v548
        %v567 = vpack.c.bf16 %v559, %v556
        %v569 = vsel %vm372, %v562, 0
        %v572 = vsel %vm372, %v564, 0
        %574 = vmatprep.subr.bf16.mxu0 0
        %575 = vmatpush1.bf16.xpose.msra.mxu0 0
        %576 = vmatprep.subr.bf16.mxu0 0
        %577 = vmatpush1.bf16.xpose.msra.mxu0 0
        %578 = vmatprep.subr.bf16.mxu0 0
        %579 = vmatpush1.bf16.xpose.msra.mxu0 0
        %580 = vmatprep.subr.bf16.mxu0 0
        %581 = vmatpush1.bf16.xpose.msra.mxu0 0
        %582 = vmatprep.subr.bf16.mxu0 0
        %583 = vmatpush1.bf16.xpose.msra.mxu0 0
        %584 = vmatprep.subr.bf16.mxu0 0
        %585 = vmatpush1.bf16.xpose.msra.mxu0 0
        %586 = vmatprep.subr.bf16.mxu0 0
        %587 = vmatpush1.bf16.xpose.msra.mxu0 0
        %588 = vmatprep.subr.bf16.mxu0 0
        %589 = vmatpush1.bf16.xpose.msra.mxu0 %v572
        %590 = vmatprep.subr.bf16.mxu0 0
        %591 = vmatpush2.bf16.xpose.msra.mxu0 0
        %592 = vmatprep.subr.bf16.mxu0 0
        %593 = vmatpush2.bf16.xpose.msra.mxu0 0
        %594 = vmatprep.subr.bf16.mxu0 0
        %595 = vmatpush2.bf16.xpose.msra.mxu0 0
        %596 = vmatprep.subr.bf16.mxu0 0
        %597 = vmatpush2.bf16.xpose.msra.mxu0 0
        %598 = vmatprep.subr.bf16.mxu0 0
        %599 = vmatpush2.bf16.xpose.msra.mxu0 0
        %600 = vmatprep.subr.bf16.mxu0 0
        %601 = vmatpush2.bf16.xpose.msra.mxu0 0
        %602 = vmatprep.subr.bf16.mxu0 0
        %603 = vmatpush2.bf16.xpose.msra.mxu0 0
        %604 = vmatprep.subr.bf16.mxu0 0
        %605 = vmatpush2.bf16.xpose.msra.mxu0 0
        %606 = vmatprep.mubr.bf16.mxu0 0
        %607 = vmatmul.mubr.bf16.gmra.mxu0 %v569
        %v608 = vpop.f32.mrf.mxu0
        %v609 = vadd.f32 0.0, %v608
        %v610 = vpop.f32.mrf.mxu0
        %v611 = vpop.f32.mrf.mxu0
        %v612 = vadd.f32 0.0, %v611
        %v613 = vpop.f32.mrf.mxu0
        %614 = vdwg.mxu0
        %v616 = vsel %vm372, %v563, 0
        %v619 = vsel %vm372, %v565, 0
        %621 = vmatprep.subr.bf16.mxu0 0
        %622 = vmatpush1.bf16.xpose.msra.mxu0 0
        %623 = vmatprep.subr.bf16.mxu0 0
        %624 = vmatpush1.bf16.xpose.msra.mxu0 0
        %625 = vmatprep.subr.bf16.mxu0 0
        %626 = vmatpush1.bf16.xpose.msra.mxu0 0
        %627 = vmatprep.subr.bf16.mxu0 0
        %628 = vmatpush1.bf16.xpose.msra.mxu0 0
        %629 = vmatprep.subr.bf16.mxu0 0
        %630 = vmatpush1.bf16.xpose.msra.mxu0 0
        %631 = vmatprep.subr.bf16.mxu0 0
        %632 = vmatpush1.bf16.xpose.msra.mxu0 0
        %633 = vmatprep.subr.bf16.mxu0 0
        %634 = vmatpush1.bf16.xpose.msra.mxu0 0
        %635 = vmatprep.subr.bf16.mxu0 0
        %636 = vmatpush1.bf16.xpose.msra.mxu0 %v619
        %637 = vmatprep.subr.bf16.mxu0 0
        %638 = vmatpush2.bf16.xpose.msra.mxu0 0
        %639 = vmatprep.subr.bf16.mxu0 0
        %640 = vmatpush2.bf16.xpose.msra.mxu0 0
        %641 = vmatprep.subr.bf16.mxu0 0
        %642 = vmatpush2.bf16.xpose.msra.mxu0 0
        %643 = vmatprep.subr.bf16.mxu0 0
        %644 = vmatpush2.bf16.xpose.msra.mxu0 0
        %645 = vmatprep.subr.bf16.mxu0 0
        %646 = vmatpush2.bf16.xpose.msra.mxu0 0
        %647 = vmatprep.subr.bf16.mxu0 0
        %648 = vmatpush2.bf16.xpose.msra.mxu0 0
        %649 = vmatprep.subr.bf16.mxu0 0
        %650 = vmatpush2.bf16.xpose.msra.mxu0 0
        %651 = vmatprep.subr.bf16.mxu0 0
        %652 = vmatpush2.bf16.xpose.msra.mxu0 0
        %653 = vmatprep.mubr.bf16.mxu0 0
        %654 = vmatmul.mubr.bf16.gmra.mxu0 %v616
        %v655 = vpop.f32.mrf.mxu0
        %v656 = vadd.f32 0.0, %v655
        %v657 = vpop.f32.mrf.mxu0
        %v658 = vpop.f32.mrf.mxu0
        %v659 = vadd.f32 0.0, %v658
        %v660 = vpop.f32.mrf.mxu0
        %661 = vdwg.mxu0
        %vm662 = vcmask 130048
        %v663 = vsel %vm662, %v609, -inf
        %664 = vmax.xlane.f32.xlu0 %v663
        %v665 = vpop.xlane.xlu0 %664
        %v666 = vsel %vm662, %v612, -inf
        %667 = vmax.xlane.f32.xlu0 %v666
        %v668 = vpop.xlane.xlu0 %667
        %v669 = vsel %vm662, %v656, -inf
        %670 = vmax.xlane.f32.xlu0 %v669
        %v671 = vpop.xlane.xlu0 %670
        %v672 = vsel %vm662, %v659, -inf
        %673 = vmax.xlane.f32.xlu0 %v672
        %v674 = vpop.xlane.xlu0 %673
        %v675 = vsub.f32 %v609, %v665
        %v676 = vsub.f32 %v612, %v668
        %v677 = vsub.f32 %v656, %v671
        %v678 = vsub.f32 %v659, %v674
        %v679 = vmul.f32 %v675, 1.442695
        %v680 = vpow.pop %v679
        %v681 = vmul.f32 %v676, 1.442695
        %v682 = vpow.pop %v681
        %v683 = vmul.f32 %v677, 1.442695
        %v684 = vpow.pop %v683
        %v685 = vmul.f32 %v678, 1.442695
        %v686 = vpow.pop %v685
        %v687 = vsel %vm662, %v680, 0.0
        %688 = vadd.xlane.f32.xlu0 %v687
        %v689 = vpop.xlane.xlu0 %688
        %v690 = vsel %vm662, %v682, 0.0
        %691 = vadd.xlane.f32.xlu0 %v690
        %v692 = vpop.xlane.xlu0 %691
        %v693 = vsel %vm662, %v684, 0.0
        %694 = vadd.xlane.f32.xlu0 %v693
        %v695 = vpop.xlane.xlu0 %694
        %v696 = vsel %vm662, %v686, 0.0
        %697 = vadd.xlane.f32.xlu0 %v696
        %v698 = vpop.xlane.xlu0 %697
        %v699 = vrcp.pop %v689
        %v700 = vrcp.pop %v692
        %v701 = vrcp.pop %v695
        %v702 = vrcp.pop %v698
        %v703 = vmul.f32 %v680, %v699
        %v704 = vmul.f32 %v682, %v700
        %v705 = vmul.f32 %v684, %v701
        %v706 = vmul.f32 %v686, %v702
        %v707 = vpack.c.bf16 %v704, %v703
        %v708 = vpack.c.bf16 %v706, %v705
        %v710 = vsel %vm662, %v707, 0
        %712 = vmatprep.subr.bf16.mxu0 0
        %713 = vmatpush1.bf16.msra.mxu0 0
        %714 = vmatprep.subr.bf16.mxu0 0
        %715 = vmatpush1.bf16.msra.mxu0 0
        %716 = vmatprep.subr.bf16.mxu0 0
        %717 = vmatpush1.bf16.msra.mxu0 0
        %718 = vmatprep.subr.bf16.mxu0 0
        %719 = vmatpush1.bf16.msra.mxu0 0
        %720 = vmatprep.subr.bf16.mxu0 0
        %721 = vmatpush1.bf16.msra.mxu0 0
        %722 = vmatprep.subr.bf16.mxu0 0
        %723 = vmatpush1.bf16.msra.mxu0 0
        %724 = vmatprep.subr.bf16.mxu0 0
        %725 = vmatpush1.bf16.msra.mxu0 0
        %726 = vmatprep.subr.bf16.mxu0 0
        %727 = vmatpush1.bf16.msra.mxu0 %v566
        %728 = vmatprep.subr.bf16.mxu0 0
        %729 = vmatpush2.bf16.msra.mxu0 0
        %730 = vmatprep.subr.bf16.mxu0 0
        %731 = vmatpush2.bf16.msra.mxu0 0
        %732 = vmatprep.subr.bf16.mxu0 0
        %733 = vmatpush2.bf16.msra.mxu0 0
        %734 = vmatprep.subr.bf16.mxu0 0
        %735 = vmatpush2.bf16.msra.mxu0 0
        %736 = vmatprep.subr.bf16.mxu0 0
        %737 = vmatpush2.bf16.msra.mxu0 0
        %738 = vmatprep.subr.bf16.mxu0 0
        %739 = vmatpush2.bf16.msra.mxu0 0
        %740 = vmatprep.subr.bf16.mxu0 0
        %741 = vmatpush2.bf16.msra.mxu0 0
        %742 = vmatprep.subr.bf16.mxu0 0
        %743 = vmatpush2.bf16.msra.mxu0 0
        %744 = vmatprep.mubr.bf16.mxu0 0
        %745 = vmatmul.mubr.bf16.gmra.mxu0 %v710
        %v746 = vpop.f32.mrf.mxu0
        %v747 = vadd.f32 0.0, %v746
        %v748 = vpop.f32.mrf.mxu0
        %v749 = vpop.f32.mrf.mxu0
        %v750 = vadd.f32 0.0, %v749
        %v751 = vpop.f32.mrf.mxu0
        %752 = vdwg.mxu0
        %v754 = vsel %vm662, %v708, 0
        %756 = vmatprep.subr.bf16.mxu0 0
        %757 = vmatpush1.bf16.msra.mxu0 0
        %758 = vmatprep.subr.bf16.mxu0 0
        %759 = vmatpush1.bf16.msra.mxu0 0
        %760 = vmatprep.subr.bf16.mxu0 0
        %761 = vmatpush1.bf16.msra.mxu0 0
        %762 = vmatprep.subr.bf16.mxu0 0
        %763 = vmatpush1.bf16.msra.mxu0 0
        %764 = vmatprep.subr.bf16.mxu0 0
        %765 = vmatpush1.bf16.msra.mxu0 0
        %766 = vmatprep.subr.bf16.mxu0 0
        %767 = vmatpush1.bf16.msra.mxu0 0
        %768 = vmatprep.subr.bf16.mxu0 0
        %769 = vmatpush1.bf16.msra.mxu0 0
        %770 = vmatprep.subr.bf16.mxu0 0
        %771 = vmatpush1.bf16.msra.mxu0 %v567
        %772 = vmatprep.subr.bf16.mxu0 0
        %773 = vmatpush2.bf16.msra.mxu0 0
        %774 = vmatprep.subr.bf16.mxu0 0
        %775 = vmatpush2.bf16.msra.mxu0 0
        %776 = vmatprep.subr.bf16.mxu0 0
        %777 = vmatpush2.bf16.msra.mxu0 0
        %778 = vmatprep.subr.bf16.mxu0 0
        %779 = vmatpush2.bf16.msra.mxu0 0
        %780 = vmatprep.subr.bf16.mxu0 0
        %781 = vmatpush2.bf16.msra.mxu0 0
        %782 = vmatprep.subr.bf16.mxu0 0
        %783 = vmatpush2.bf16.msra.mxu0 0
        %784 = vmatprep.subr.bf16.mxu0 0
        %785 = vmatpush2.bf16.msra.mxu0 0
        %786 = vmatprep.subr.bf16.mxu0 0
        %787 = vmatpush2.bf16.msra.mxu0 0
        %788 = vmatprep.mubr.bf16.mxu0 0
        %789 = vmatmul.mubr.bf16.gmra.mxu0 %v754
        %v790 = vpop.f32.mrf.mxu0
        %v791 = vadd.f32 0.0, %v790
        %v792 = vpop.f32.mrf.mxu0
        %v793 = vpop.f32.mrf.mxu0
        %v794 = vadd.f32 0.0, %v793
        %v795 = vpop.f32.mrf.mxu0
        %796 = vdwg.mxu0
        %v797 = vpack.c.bf16 %v750, %v747
        %v798 = vpack.c.bf16 %v794, %v791
        %v799 = vld [vmem:[%s5] sm:$0xf]
        %v800 = vld [vmem:[%s5 + $0x4] sm:$0xf]
        %v801 = vld [vmem:[%s5 + $0x8] sm:$0xf]
        %v802 = vld [vmem:[%s5 + $0xc] sm:$0xf]
        %v807 = vunpack.c.l.b16 %v799
        %v808 = vunpack.c.l.b16 %v800
        %v809 = vunpack.c.l.b16 %v801
        %v810 = vunpack.c.l.b16 %v802
        %v811 = vpack.c.b16 %v808, %v807
        %v812 = vpack.c.b16 %v810, %v809
        %v816 = vsel %vm372, %v797, 0
        %v819 = vsel %vm372, %v798, 0
        %821 = vmatprep.subr.bf16.mxu0 0
        %822 = vmatpush1.bf16.msra.mxu0 0
        %823 = vmatprep.subr.bf16.mxu0 0
        %824 = vmatpush1.bf16.msra.mxu0 0
        %825 = vmatprep.subr.bf16.mxu0 0
        %826 = vmatpush1.bf16.msra.mxu0 0
        %827 = vmatprep.subr.bf16.mxu0 0
        %828 = vmatpush1.bf16.msra.mxu0 0
        %829 = vmatprep.subr.bf16.mxu0 0
        %830 = vmatpush1.bf16.msra.mxu0 0
        %831 = vmatprep.subr.bf16.mxu0 0
        %832 = vmatpush1.bf16.msra.mxu0 0
        %833 = vmatprep.subr.bf16.mxu0 0
        %834 = vmatpush1.bf16.msra.mxu0 %v812
        %835 = vmatprep.subr.bf16.mxu0 0
        %836 = vmatpush1.bf16.msra.mxu0 %v811
        %837 = vmatprep.subr.bf16.mxu0 0
        %838 = vmatpush2.bf16.msra.mxu0 0
        %839 = vmatprep.subr.bf16.mxu0 0
        %840 = vmatpush2.bf16.msra.mxu0 0
        %841 = vmatprep.subr.bf16.mxu0 0
        %842 = vmatpush2.bf16.msra.mxu0 0
        %843 = vmatprep.subr.bf16.mxu0 0
        %844 = vmatpush2.bf16.msra.mxu0 0
        %845 = vmatprep.subr.bf16.mxu0 0
        %846 = vmatpush2.bf16.msra.mxu0 0
        %847 = vmatprep.subr.bf16.mxu0 0
        %848 = vmatpush2.bf16.msra.mxu0 0
        %849 = vmatprep.subr.bf16.mxu0 0
        %850 = vmatpush2.bf16.msra.mxu0 0
        %851 = vmatprep.subr.bf16.mxu0 0
        %852 = vmatpush2.bf16.msra.mxu0 0
        %853 = vmatprep.mubr.bf16.mxu0 0
        %854 = vmatmul.mubr.bf16.gmra.mxu0 %v816
        %v855 = vpop.f32.mrf.mxu0
        %v856 = vadd.f32 0.0, %v855
        %v857 = vpop.f32.mrf.mxu0
        %v858 = vpop.f32.mrf.mxu0
        %v859 = vadd.f32 0.0, %v858
        %v860 = vpop.f32.mrf.mxu0
        %861 = vmatprep.mubr.bf16.mxu0 0
        %862 = vmatmul.mubr.bf16.gmra.mxu0 %v819
        %v863 = vpop.f32.mrf.mxu0
        %v864 = vadd.f32 0.0, %v863
        %v865 = vpop.f32.mrf.mxu0
        %v866 = vpop.f32.mrf.mxu0
        %v867 = vadd.f32 0.0, %v866
        %v868 = vpop.f32.mrf.mxu0
        %869 = vdwg.mxu0
        %v870 = vadd.f32 %v350, %v856
        %v871 = vadd.f32 %v351, %v859
        %v872 = vadd.f32 %v352, %v864
        %v873 = vadd.f32 %v353, %v867
        %v874 = vld [vmem:[%s1] sm:$0xff]
        %v875 = vld [vmem:[%s1 + $0x8] sm:$0xff]
        %v877 = vsel %vm662, %v874, 0
        %v880 = vsel %vm662, %v875, 0
        %882 = vmatprep.subr.mxu0 0.0
        %883 = vmatpush1.msra.mxu0 0.0
        %884 = vmatprep.subr.mxu0 0.0
        %885 = vmatpush1.msra.mxu0 0.0
        %886 = vmatprep.subr.mxu0 0.0
        %887 = vmatpush1.msra.mxu0 0.0
        %888 = vmatprep.subr.mxu0 0.0
        %889 = vmatpush1.msra.mxu0 0.0
        %890 = vmatprep.subr.mxu0 0.0
        %891 = vmatpush1.msra.mxu0 0.0
        %892 = vmatprep.subr.mxu0 0.0
        %893 = vmatpush1.msra.mxu0 0.0
        %894 = vmatprep.subr.mxu0 0.0
        %895 = vmatpush1.msra.mxu0 0.0
        %896 = vmatprep.subr.mxu0 0.0
        %897 = vmatpush1.msra.mxu0 0.0
        %898 = vmatprep.subr.mxu0 0.0
        %899 = vmatpush1.msra.mxu0 0.0
        %900 = vmatprep.subr.mxu0 0.0
        %901 = vmatpush1.msra.mxu0 0.0
        %902 = vmatprep.subr.mxu0 0.0
        %903 = vmatpush1.msra.mxu0 0.0
        %904 = vmatprep.subr.mxu0 0.0
        %905 = vmatpush1.msra.mxu0 0.0
        %906 = vmatprep.subr.mxu0 0.0
        %907 = vmatpush1.msra.mxu0 0.0
        %908 = vmatprep.subr.mxu0 0.0
        %909 = vmatpush1.msra.mxu0 0.0
        %910 = vmatprep.subr.mxu0 0.0
        %911 = vmatpush1.msra.mxu0 %v871
        %912 = vmatprep.subr.mxu0 0.0
        %913 = vmatpush1.msra.mxu0 %v870
        %914 = vmatprep.subr.mxu0 0.0
        %915 = vmatpush2.msra.mxu0 0.0
        %916 = vmatprep.subr.mxu0 0.0
        %917 = vmatpush2.msra.mxu0 0.0
        %918 = vmatprep.subr.mxu0 0.0
        %919 = vmatpush2.msra.mxu0 0.0
        %920 = vmatprep.subr.mxu0 0.0
        %921 = vmatpush2.msra.mxu0 0.0
        %922 = vmatprep.subr.mxu0 0.0
        %923 = vmatpush2.msra.mxu0 0.0
        %924 = vmatprep.subr.mxu0 0.0
        %925 = vmatpush2.msra.mxu0 0.0
        %926 = vmatprep.subr.mxu0 0.0
        %927 = vmatpush2.msra.mxu0 0.0
        %928 = vmatprep.subr.mxu0 0.0
        %929 = vmatpush2.msra.mxu0 0.0
        %930 = vmatprep.subr.mxu0 0.0
        %931 = vmatpush2.msra.mxu0 0.0
        %932 = vmatprep.subr.mxu0 0.0
        %933 = vmatpush2.msra.mxu0 0.0
        %934 = vmatprep.subr.mxu0 0.0
        %935 = vmatpush2.msra.mxu0 0.0
        %936 = vmatprep.subr.mxu0 0.0
        %937 = vmatpush2.msra.mxu0 0.0
        %938 = vmatprep.subr.mxu0 0.0
        %939 = vmatpush2.msra.mxu0 0.0
        %940 = vmatprep.subr.mxu0 0.0
        %941 = vmatpush2.msra.mxu0 0.0
        %942 = vmatprep.subr.mxu0 0.0
        %943 = vmatpush2.msra.mxu0 0.0
        %944 = vmatprep.subr.mxu0 0.0
        %945 = vmatpush2.msra.mxu0 0.0
        %946 = vmatprep.mubr.f32.mxu0 0.0
        %947 = vmatmul.mubr.f32.gmra.mxu0 %v877
        %v948 = vpop.f32.mrf.mxu0
        %v949 = vadd.f32 0.0, %v948
        %v950 = vpop.f32.mrf.mxu0
        %951 = vmatprep.mubr.f32.mxu0 0.0
        %952 = vmatmul.mubr.f32.gmra.mxu0 %v880
        %v953 = vpop.f32.mrf.mxu0
        %v954 = vadd.f32 0.0, %v953
        %v955 = vpop.f32.mrf.mxu0
        %956 = vdwg.mxu0
        %957 = vmatprep.subr.mxu0 0.0
        %958 = vmatpush1.msra.mxu0 0.0
        %959 = vmatprep.subr.mxu0 0.0
        %960 = vmatpush1.msra.mxu0 0.0
        %961 = vmatprep.subr.mxu0 0.0
        %962 = vmatpush1.msra.mxu0 0.0
        %963 = vmatprep.subr.mxu0 0.0
        %964 = vmatpush1.msra.mxu0 0.0
        %965 = vmatprep.subr.mxu0 0.0
        %966 = vmatpush1.msra.mxu0 0.0
        %967 = vmatprep.subr.mxu0 0.0
        %968 = vmatpush1.msra.mxu0 0.0
        %969 = vmatprep.subr.mxu0 0.0
        %970 = vmatpush1.msra.mxu0 0.0
        %971 = vmatprep.subr.mxu0 0.0
        %972 = vmatpush1.msra.mxu0 0.0
        %973 = vmatprep.subr.mxu0 0.0
        %974 = vmatpush1.msra.mxu0 0.0
        %975 = vmatprep.subr.mxu0 0.0
        %976 = vmatpush1.msra.mxu0 0.0
        %977 = vmatprep.subr.mxu0 0.0
        %978 = vmatpush1.msra.mxu0 0.0
        %979 = vmatprep.subr.mxu0 0.0
        %980 = vmatpush1.msra.mxu0 0.0
        %981 = vmatprep.subr.mxu0 0.0
        %982 = vmatpush1.msra.mxu0 0.0
        %983 = vmatprep.subr.mxu0 0.0
        %984 = vmatpush1.msra.mxu0 0.0
        %985 = vmatprep.subr.mxu0 0.0
        %986 = vmatpush1.msra.mxu0 %v873
        %987 = vmatprep.subr.mxu0 0.0
        %988 = vmatpush1.msra.mxu0 %v872
        %989 = vmatprep.subr.mxu0 0.0
        %990 = vmatpush2.msra.mxu0 0.0
        %991 = vmatprep.subr.mxu0 0.0
        %992 = vmatpush2.msra.mxu0 0.0
        %993 = vmatprep.subr.mxu0 0.0
        %994 = vmatpush2.msra.mxu0 0.0
        %995 = vmatprep.subr.mxu0 0.0
        %996 = vmatpush2.msra.mxu0 0.0
        %997 = vmatprep.subr.mxu0 0.0
        %998 = vmatpush2.msra.mxu0 0.0
        %999 = vmatprep.subr.mxu0 0.0
        %1000 = vmatpush2.msra.mxu0 0.0
        %1001 = vmatprep.subr.mxu0 0.0
        %1002 = vmatpush2.msra.mxu0 0.0
        %1003 = vmatprep.subr.mxu0 0.0
        %1004 = vmatpush2.msra.mxu0 0.0
        %1005 = vmatprep.subr.mxu0 0.0
        %1006 = vmatpush2.msra.mxu0 0.0
        %1007 = vmatprep.subr.mxu0 0.0
        %1008 = vmatpush2.msra.mxu0 0.0
        %1009 = vmatprep.subr.mxu0 0.0
        %1010 = vmatpush2.msra.mxu0 0.0
        %1011 = vmatprep.subr.mxu0 0.0
        %1012 = vmatpush2.msra.mxu0 0.0
        %1013 = vmatprep.subr.mxu0 0.0
        %1014 = vmatpush2.msra.mxu0 0.0
        %1015 = vmatprep.subr.mxu0 0.0
        %1016 = vmatpush2.msra.mxu0 0.0
        %1017 = vmatprep.subr.mxu0 0.0
        %1018 = vmatpush2.msra.mxu0 0.0
        %1019 = vmatprep.subr.mxu0 0.0
        %1020 = vmatpush2.msra.mxu0 0.0
        %1021 = vmatprep.mubr.f32.mxu0 0.0
        %1022 = vmatmul.mubr.f32.gmra.mxu0 %v877
        %v1023 = vpop.f32.mrf.mxu0
        %v1024 = vadd.f32 0.0, %v1023
        %v1025 = vpop.f32.mrf.mxu0
        %1026 = vmatprep.mubr.f32.mxu0 0.0
        %1027 = vmatmul.mubr.f32.gmra.mxu0 %v880
        %v1028 = vpop.f32.mrf.mxu0
        %v1029 = vadd.f32 0.0, %v1028
        %v1030 = vpop.f32.mrf.mxu0
        %1031 = vdwg.mxu0
        %v1032 = vsub.f32 %v870, %v949
        %v1033 = vsub.f32 %v871, %v954
        %v1034 = vsub.f32 %v872, %v1024
        %v1035 = vsub.f32 %v873, %v1029
        %v1036 = vpack.c.bf16 %v1033, %v1032
        %v1037 = vpack.c.bf16 %v1035, %v1034
        %v1038 = vld [vmem:[%s6] sm:$0xf]
        %v1039 = vld [vmem:[%s6 + $0x4] sm:$0xf]
        %v1040 = vld [vmem:[%s6 + $0x8] sm:$0xf]
        %v1041 = vld [vmem:[%s6 + $0xc] sm:$0xf]
        %v1042 = vld [vmem:[%s7] sm:$0xf]
        %v1043 = vld [vmem:[%s7 + $0x4] sm:$0xf]
        %v1044 = vld [vmem:[%s7 + $0x8] sm:$0xf]
        %v1045 = vld [vmem:[%s7 + $0xc] sm:$0xf]
        %v1046 = vld [vmem:[%s7 + $0x10] sm:$0xf]
        %v1047 = vld [vmem:[%s7 + $0x14] sm:$0xf]
        %v1048 = vld [vmem:[%s7 + $0x18] sm:$0xf]
        %v1049 = vld [vmem:[%s7 + $0x1c] sm:$0xf]
        %v1050 = vld [vmem:[%s7 + $0x20] sm:$0xf]
        %v1051 = vld [vmem:[%s7 + $0x24] sm:$0xf]
        %v1052 = vld [vmem:[%s7 + $0x28] sm:$0xf]
        %v1053 = vld [vmem:[%s7 + $0x2c] sm:$0xf]
        %v1054 = vld [vmem:[%s7 + $0x30] sm:$0xf]
        %v1055 = vld [vmem:[%s7 + $0x34] sm:$0xf]
        %v1056 = vld [vmem:[%s7 + $0x38] sm:$0xf]
        %v1057 = vld [vmem:[%s7 + $0x3c] sm:$0xf]
        %v1062 = vunpack.c.l.b16 %v1038
        %v1063 = vunpack.c.l.b16 %v1039
        %v1064 = vunpack.c.l.b16 %v1040
        %v1065 = vunpack.c.l.b16 %v1041
        %v1066 = vpack.c.b16 %v1063, %v1062
        %v1067 = vpack.c.b16 %v1065, %v1064
        %v1071 = vsel %vm372, %v1036, 0
        %v1074 = vsel %vm372, %v1037, 0
        %1076 = vmatprep.subr.bf16.mxu0 0
        %1077 = vmatpush1.bf16.msra.mxu0 0
        %1078 = vmatprep.subr.bf16.mxu0 0
        %1079 = vmatpush1.bf16.msra.mxu0 0
        %1080 = vmatprep.subr.bf16.mxu0 0
        %1081 = vmatpush1.bf16.msra.mxu0 0
        %1082 = vmatprep.subr.bf16.mxu0 0
        %1083 = vmatpush1.bf16.msra.mxu0 0
        %1084 = vmatprep.subr.bf16.mxu0 0
        %1085 = vmatpush1.bf16.msra.mxu0 0
        %1086 = vmatprep.subr.bf16.mxu0 0
        %1087 = vmatpush1.bf16.msra.mxu0 0
        %1088 = vmatprep.subr.bf16.mxu0 0
        %1089 = vmatpush1.bf16.msra.mxu0 %v1067
        %1090 = vmatprep.subr.bf16.mxu0 0
        %1091 = vmatpush1.bf16.msra.mxu0 %v1066
        %1092 = vmatprep.subr.bf16.mxu0 0
        %1093 = vmatpush2.bf16.msra.mxu0 0
        %1094 = vmatprep.subr.bf16.mxu0 0
        %1095 = vmatpush2.bf16.msra.mxu0 0
        %1096 = vmatprep.subr.bf16.mxu0 0
        %1097 = vmatpush2.bf16.msra.mxu0 0
        %1098 = vmatprep.subr.bf16.mxu0 0
        %1099 = vmatpush2.bf16.msra.mxu0 0
        %1100 = vmatprep.subr.bf16.mxu0 0
        %1101 = vmatpush2.bf16.msra.mxu0 0
        %1102 = vmatprep.subr.bf16.mxu0 0
        %1103 = vmatpush2.bf16.msra.mxu0 0
        %1104 = vmatprep.subr.bf16.mxu0 0
        %1105 = vmatpush2.bf16.msra.mxu0 0
        %1106 = vmatprep.subr.bf16.mxu0 0
        %1107 = vmatpush2.bf16.msra.mxu0 0
        %1108 = vmatprep.mubr.bf16.mxu0 0
        %1109 = vmatmul.mubr.bf16.gmra.mxu0 %v1071
        %v1110 = vpop.f32.mrf.mxu0
        %v1111 = vadd.f32 0.0, %v1110
        %v1112 = vpop.f32.mrf.mxu0
        %v1113 = vpop.f32.mrf.mxu0
        %v1114 = vadd.f32 0.0, %v1113
        %v1115 = vpop.f32.mrf.mxu0
        %1116 = vmatprep.mubr.bf16.mxu0 0
        %1117 = vmatmul.mubr.bf16.gmra.mxu0 %v1074
        %v1118 = vpop.f32.mrf.mxu0
        %v1119 = vadd.f32 0.0, %v1118
        %v1120 = vpop.f32.mrf.mxu0
        %v1121 = vpop.f32.mrf.mxu0
        %v1122 = vadd.f32 0.0, %v1121
        %v1123 = vpop.f32.mrf.mxu0
        %1124 = vdwg.mxu0
        %v1125 = vmax.f32 %v1111, 0.0
        %v1126 = vmax.f32 %v1114, 0.0
        %v1127 = vmax.f32 %v1119, 0.0
        %v1128 = vmax.f32 %v1122, 0.0
        %v1129 = vpack.c.bf16 %v1126, %v1125
        %v1130 = vpack.c.bf16 %v1128, %v1127
        %s1131 = scalar_lea.vmem %s6, 16
        %v1132 = vld [vmem:[%s1131] sm:$0xf]
        %v1133 = vld [vmem:[%s1131 + $0x4] sm:$0xf]
        %v1134 = vld [vmem:[%s1131 + $0x8] sm:$0xf]
        %v1135 = vld [vmem:[%s1131 + $0xc] sm:$0xf]
        %s1136 = scalar_lea.vmem %s7, 64
        %v1137 = vld [vmem:[%s1136] sm:$0xf]
        %v1138 = vld [vmem:[%s1136 + $0x4] sm:$0xf]
        %v1139 = vld [vmem:[%s1136 + $0x8] sm:$0xf]
        %v1140 = vld [vmem:[%s1136 + $0xc] sm:$0xf]
        %v1141 = vld [vmem:[%s1136 + $0x10] sm:$0xf]
        %v1142 = vld [vmem:[%s1136 + $0x14] sm:$0xf]
        %v1143 = vld [vmem:[%s1136 + $0x18] sm:$0xf]
        %v1144 = vld [vmem:[%s1136 + $0x1c] sm:$0xf]
        %v1145 = vld [vmem:[%s1136 + $0x20] sm:$0xf]
        %v1146 = vld [vmem:[%s1136 + $0x24] sm:$0xf]
        %v1147 = vld [vmem:[%s1136 + $0x28] sm:$0xf]
        %v1148 = vld [vmem:[%s1136 + $0x2c] sm:$0xf]
        %v1149 = vld [vmem:[%s1136 + $0x30] sm:$0xf]
        %v1150 = vld [vmem:[%s1136 + $0x34] sm:$0xf]
        %v1151 = vld [vmem:[%s1136 + $0x38] sm:$0xf]
        %v1152 = vld [vmem:[%s1136 + $0x3c] sm:$0xf]
        %v1157 = vunpack.c.l.b16 %v1132
        %v1158 = vunpack.c.l.b16 %v1133
        %v1159 = vunpack.c.l.b16 %v1134
        %v1160 = vunpack.c.l.b16 %v1135
        %v1161 = vpack.c.b16 %v1158, %v1157
        %v1162 = vpack.c.b16 %v1160, %v1159
        %1165 = vmatprep.subr.bf16.mxu0 0
        %1166 = vmatpush1.bf16.msra.mxu0 0
        %1167 = vmatprep.subr.bf16.mxu0 0
        %1168 = vmatpush1.bf16.msra.mxu0 0
        %1169 = vmatprep.subr.bf16.mxu0 0
        %1170 = vmatpush1.bf16.msra.mxu0 0
        %1171 = vmatprep.subr.bf16.mxu0 0
        %1172 = vmatpush1.bf16.msra.mxu0 0
        %1173 = vmatprep.subr.bf16.mxu0 0
        %1174 = vmatpush1.bf16.msra.mxu0 0
        %1175 = vmatprep.subr.bf16.mxu0 0
        %1176 = vmatpush1.bf16.msra.mxu0 0
        %1177 = vmatprep.subr.bf16.mxu0 0
        %1178 = vmatpush1.bf16.msra.mxu0 %v1162
        %1179 = vmatprep.subr.bf16.mxu0 0
        %1180 = vmatpush1.bf16.msra.mxu0 %v1161
        %1181 = vmatprep.subr.bf16.mxu0 0
        %1182 = vmatpush2.bf16.msra.mxu0 0
        %1183 = vmatprep.subr.bf16.mxu0 0
        %1184 = vmatpush2.bf16.msra.mxu0 0
        %1185 = vmatprep.subr.bf16.mxu0 0
        %1186 = vmatpush2.bf16.msra.mxu0 0
        %1187 = vmatprep.subr.bf16.mxu0 0
        %1188 = vmatpush2.bf16.msra.mxu0 0
        %1189 = vmatprep.subr.bf16.mxu0 0
        %1190 = vmatpush2.bf16.msra.mxu0 0
        %1191 = vmatprep.subr.bf16.mxu0 0
        %1192 = vmatpush2.bf16.msra.mxu0 0
        %1193 = vmatprep.subr.bf16.mxu0 0
        %1194 = vmatpush2.bf16.msra.mxu0 0
        %1195 = vmatprep.subr.bf16.mxu0 0
        %1196 = vmatpush2.bf16.msra.mxu0 0
        %1197 = vmatprep.mubr.bf16.mxu0 0
        %1198 = vmatmul.mubr.bf16.gmra.mxu0 %v1071
        %v1199 = vpop.f32.mrf.mxu0
        %v1200 = vadd.f32 0.0, %v1199
        %v1201 = vpop.f32.mrf.mxu0
        %v1202 = vpop.f32.mrf.mxu0
        %v1203 = vadd.f32 0.0, %v1202
        %v1204 = vpop.f32.mrf.mxu0
        %1205 = vmatprep.mubr.bf16.mxu0 0
        %1206 = vmatmul.mubr.bf16.gmra.mxu0 %v1074
        %v1207 = vpop.f32.mrf.mxu0
        %v1208 = vadd.f32 0.0, %v1207
        %v1209 = vpop.f32.mrf.mxu0
        %v1210 = vpop.f32.mrf.mxu0
        %v1211 = vadd.f32 0.0, %v1210
        %v1212 = vpop.f32.mrf.mxu0
        %1213 = vdwg.mxu0
        %v1214 = vmax.f32 %v1200, 0.0
        %v1215 = vmax.f32 %v1203, 0.0
        %v1216 = vmax.f32 %v1208, 0.0
        %v1217 = vmax.f32 %v1211, 0.0
        %v1218 = vpack.c.bf16 %v1215, %v1214
        %v1219 = vpack.c.bf16 %v1217, %v1216
        %v1236 = vunpack.c.l.b16 %v1137
        %v1237 = vunpack.c.l.b16 %v1138
        %v1238 = vunpack.c.l.b16 %v1139
        %v1239 = vunpack.c.l.b16 %v1140
        %v1240 = vunpack.c.l.b16 %v1141
        %v1241 = vunpack.c.l.b16 %v1142
        %v1242 = vunpack.c.l.b16 %v1143
        %v1243 = vunpack.c.l.b16 %v1144
        %v1244 = vunpack.c.l.b16 %v1145
        %v1245 = vunpack.c.l.b16 %v1146
        %v1246 = vunpack.c.l.b16 %v1147
        %v1247 = vunpack.c.l.b16 %v1148
        %v1248 = vunpack.c.l.b16 %v1149
        %v1249 = vunpack.c.l.b16 %v1150
        %v1250 = vunpack.c.l.b16 %v1151
        %v1251 = vunpack.c.l.b16 %v1152
        %v1252 = vpack.c.b16 %v1237, %v1236
        %v1253 = vpack.c.b16 %v1239, %v1238
        %v1254 = vpack.c.b16 %v1241, %v1240
        %v1255 = vpack.c.b16 %v1243, %v1242
        %v1256 = vpack.c.b16 %v1245, %v1244
        %v1257 = vpack.c.b16 %v1247, %v1246
        %v1258 = vpack.c.b16 %v1249, %v1248
        %v1259 = vpack.c.b16 %v1251, %v1250
        %1268 = vmatprep.subr.bf16.mxu0 0
        %1269 = vmatpush1.bf16.msra.mxu0 %v1259
        %1270 = vmatprep.subr.bf16.mxu0 0
        %1271 = vmatpush1.bf16.msra.mxu0 %v1258
        %1272 = vmatprep.subr.bf16.mxu0 0
        %1273 = vmatpush1.bf16.msra.mxu0 %v1257
        %1274 = vmatprep.subr.bf16.mxu0 0
        %1275 = vmatpush1.bf16.msra.mxu0 %v1256
        %1276 = vmatprep.subr.bf16.mxu0 0
        %1277 = vmatpush1.bf16.msra.mxu0 %v1255
        %1278 = vmatprep.subr.bf16.mxu0 0
        %1279 = vmatpush1.bf16.msra.mxu0 %v1254
        %1280 = vmatprep.subr.bf16.mxu0 0
        %1281 = vmatpush1.bf16.msra.mxu0 %v1253
        %1282 = vmatprep.subr.bf16.mxu0 0
        %1283 = vmatpush1.bf16.msra.mxu0 %v1252
        %1284 = vmatprep.subr.bf16.mxu0 0
        %1285 = vmatpush2.bf16.msra.mxu0 0
        %1286 = vmatprep.subr.bf16.mxu0 0
        %1287 = vmatpush2.bf16.msra.mxu0 0
        %1288 = vmatprep.subr.bf16.mxu0 0
        %1289 = vmatpush2.bf16.msra.mxu0 0
        %1290 = vmatprep.subr.bf16.mxu0 0
        %1291 = vmatpush2.bf16.msra.mxu0 0
        %1292 = vmatprep.subr.bf16.mxu0 0
        %1293 = vmatpush2.bf16.msra.mxu0 0
        %1294 = vmatprep.subr.bf16.mxu0 0
        %1295 = vmatpush2.bf16.msra.mxu0 0
        %1296 = vmatprep.subr.bf16.mxu0 0
        %1297 = vmatpush2.bf16.msra.mxu0 0
        %1298 = vmatprep.subr.bf16.mxu0 0
        %1299 = vmatpush2.bf16.msra.mxu0 0
        %1300 = vmatprep.mubr.bf16.mxu0 0
        %1301 = vmatmul.mubr.bf16.gmra.mxu0 %v1218
        %v1302 = vpop.f32.mrf.mxu0
        %v1303 = vadd.f32 0.0, %v1302
        %v1304 = vpop.f32.mrf.mxu0
        %v1305 = vpop.f32.mrf.mxu0
        %v1306 = vadd.f32 0.0, %v1305
        %v1307 = vpop.f32.mrf.mxu0
        %1308 = vmatprep.mubr.bf16.mxu0 0
        %1309 = vmatmul.mubr.bf16.gmra.mxu0 %v1219
        %v1310 = vpop.f32.mrf.mxu0
        %v1311 = vadd.f32 0.0, %v1310
        %v1312 = vpop.f32.mrf.mxu0
        %v1313 = vpop.f32.mrf.mxu0
        %v1314 = vadd.f32 0.0, %v1313
        %v1315 = vpop.f32.mrf.mxu0
        %1316 = vdwg.mxu0
        %v1333 = vunpack.c.l.b16 %v1042
        %v1334 = vunpack.c.l.b16 %v1043
        %v1335 = vunpack.c.l.b16 %v1044
        %v1336 = vunpack.c.l.b16 %v1045
        %v1337 = vunpack.c.l.b16 %v1046
        %v1338 = vunpack.c.l.b16 %v1047
        %v1339 = vunpack.c.l.b16 %v1048
        %v1340 = vunpack.c.l.b16 %v1049
        %v1341 = vunpack.c.l.b16 %v1050
        %v1342 = vunpack.c.l.b16 %v1051
        %v1343 = vunpack.c.l.b16 %v1052
        %v1344 = vunpack.c.l.b16 %v1053
        %v1345 = vunpack.c.l.b16 %v1054
        %v1346 = vunpack.c.l.b16 %v1055
        %v1347 = vunpack.c.l.b16 %v1056
        %v1348 = vunpack.c.l.b16 %v1057
        %v1349 = vpack.c.b16 %v1334, %v1333
        %v1350 = vpack.c.b16 %v1336, %v1335
        %v1351 = vpack.c.b16 %v1338, %v1337
        %v1352 = vpack.c.b16 %v1340, %v1339
        %v1353 = vpack.c.b16 %v1342, %v1341
        %v1354 = vpack.c.b16 %v1344, %v1343
        %v1355 = vpack.c.b16 %v1346, %v1345
        %v1356 = vpack.c.b16 %v1348, %v1347
        %1365 = vmatprep.subr.bf16.mxu0 0
        %1366 = vmatpush1.bf16.msra.mxu0 %v1356
        %1367 = vmatprep.subr.bf16.mxu0 0
        %1368 = vmatpush1.bf16.msra.mxu0 %v1355
        %1369 = vmatprep.subr.bf16.mxu0 0
        %1370 = vmatpush1.bf16.msra.mxu0 %v1354
        %1371 = vmatprep.subr.bf16.mxu0 0
        %1372 = vmatpush1.bf16.msra.mxu0 %v1353
        %1373 = vmatprep.subr.bf16.mxu0 0
        %1374 = vmatpush1.bf16.msra.mxu0 %v1352
        %1375 = vmatprep.subr.bf16.mxu0 0
        %1376 = vmatpush1.bf16.msra.mxu0 %v1351
        %1377 = vmatprep.subr.bf16.mxu0 0
        %1378 = vmatpush1.bf16.msra.mxu0 %v1350
        %1379 = vmatprep.subr.bf16.mxu0 0
        %1380 = vmatpush1.bf16.msra.mxu0 %v1349
        %1381 = vmatprep.subr.bf16.mxu0 0
        %1382 = vmatpush2.bf16.msra.mxu0 0
        %1383 = vmatprep.subr.bf16.mxu0 0
        %1384 = vmatpush2.bf16.msra.mxu0 0
        %1385 = vmatprep.subr.bf16.mxu0 0
        %1386 = vmatpush2.bf16.msra.mxu0 0
        %1387 = vmatprep.subr.bf16.mxu0 0
        %1388 = vmatpush2.bf16.msra.mxu0 0
        %1389 = vmatprep.subr.bf16.mxu0 0
        %1390 = vmatpush2.bf16.msra.mxu0 0
        %1391 = vmatprep.subr.bf16.mxu0 0
        %1392 = vmatpush2.bf16.msra.mxu0 0
        %1393 = vmatprep.subr.bf16.mxu0 0
        %1394 = vmatpush2.bf16.msra.mxu0 0
        %1395 = vmatprep.subr.bf16.mxu0 0
        %1396 = vmatpush2.bf16.msra.mxu0 0
        %1397 = vmatprep.mubr.bf16.mxu0 0
        %1398 = vmatmul.mubr.bf16.gmra.mxu0 %v1129
        %v1399 = vpop.f32.mrf.mxu0
        %v1400 = vadd.f32 %v1303, %v1399
        %v1401 = vpop.f32.mrf.mxu0
        %v1402 = vpop.f32.mrf.mxu0
        %v1403 = vadd.f32 %v1306, %v1402
        %v1404 = vpop.f32.mrf.mxu0
        %1405 = vmatprep.mubr.bf16.mxu0 0
        %1406 = vmatmul.mubr.bf16.gmra.mxu0 %v1130
        %v1407 = vpop.f32.mrf.mxu0
        %v1408 = vadd.f32 %v1311, %v1407
        %v1409 = vpop.f32.mrf.mxu0
        %v1410 = vpop.f32.mrf.mxu0
        %v1411 = vadd.f32 %v1314, %v1410
        %v1412 = vpop.f32.mrf.mxu0
        %1413 = vdwg.mxu0
        %v1414 = vadd.f32 %v1400, %v1032
        %v1415 = vadd.f32 %v1403, %v1033
        %v1416 = vadd.f32 %v1408, %v1034
        %v1417 = vadd.f32 %v1411, %v1035
        %1418 = vmatprep.subr.mxu0 0.0
        %1419 = vmatpush1.msra.mxu0 0.0
        %1420 = vmatprep.subr.mxu0 0.0
        %1421 = vmatpush1.msra.mxu0 0.0
        %1422 = vmatprep.subr.mxu0 0.0
        %1423 = vmatpush1.msra.mxu0 0.0
        %1424 = vmatprep.subr.mxu0 0.0
        %1425 = vmatpush1.msra.mxu0 0.0
        %1426 = vmatprep.subr.mxu0 0.0
        %1427 = vmatpush1.msra.mxu0 0.0
        %1428 = vmatprep.subr.mxu0 0.0
        %1429 = vmatpush1.msra.mxu0 0.0
        %1430 = vmatprep.subr.mxu0 0.0
        %1431 = vmatpush1.msra.mxu0 0.0
        %1432 = vmatprep.subr.mxu0 0.0
        %1433 = vmatpush1.msra.mxu0 0.0
        %1434 = vmatprep.subr.mxu0 0.0
        %1435 = vmatpush1.msra.mxu0 0.0
        %1436 = vmatprep.subr.mxu0 0.0
        %1437 = vmatpush1.msra.mxu0 0.0
        %1438 = vmatprep.subr.mxu0 0.0
        %1439 = vmatpush1.msra.mxu0 0.0
        %1440 = vmatprep.subr.mxu0 0.0
        %1441 = vmatpush1.msra.mxu0 0.0
        %1442 = vmatprep.subr.mxu0 0.0
        %1443 = vmatpush1.msra.mxu0 0.0
        %1444 = vmatprep.subr.mxu0 0.0
        %1445 = vmatpush1.msra.mxu0 0.0
        %1446 = vmatprep.subr.mxu0 0.0
        %1447 = vmatpush1.msra.mxu0 %v1415
        %1448 = vmatprep.subr.mxu0 0.0
        %1449 = vmatpush1.msra.mxu0 %v1414
        %1450 = vmatprep.subr.mxu0 0.0
        %1451 = vmatpush2.msra.mxu0 0.0
        %1452 = vmatprep.subr.mxu0 0.0
        %1453 = vmatpush2.msra.mxu0 0.0
        %1454 = vmatprep.subr.mxu0 0.0
        %1455 = vmatpush2.msra.mxu0 0.0
        %1456 = vmatprep.subr.mxu0 0.0
        %1457 = vmatpush2.msra.mxu0 0.0
        %1458 = vmatprep.subr.mxu0 0.0
        %1459 = vmatpush2.msra.mxu0 0.0
        %1460 = vmatprep.subr.mxu0 0.0
        %1461 = vmatpush2.msra.mxu0 0.0
        %1462 = vmatprep.subr.mxu0 0.0
        %1463 = vmatpush2.msra.mxu0 0.0
        %1464 = vmatprep.subr.mxu0 0.0
        %1465 = vmatpush2.msra.mxu0 0.0
        %1466 = vmatprep.subr.mxu0 0.0
        %1467 = vmatpush2.msra.mxu0 0.0
        %1468 = vmatprep.subr.mxu0 0.0
        %1469 = vmatpush2.msra.mxu0 0.0
        %1470 = vmatprep.subr.mxu0 0.0
        %1471 = vmatpush2.msra.mxu0 0.0
        %1472 = vmatprep.subr.mxu0 0.0
        %1473 = vmatpush2.msra.mxu0 0.0
        %1474 = vmatprep.subr.mxu0 0.0
        %1475 = vmatpush2.msra.mxu0 0.0
        %1476 = vmatprep.subr.mxu0 0.0
        %1477 = vmatpush2.msra.mxu0 0.0
        %1478 = vmatprep.subr.mxu0 0.0
        %1479 = vmatpush2.msra.mxu0 0.0
        %1480 = vmatprep.subr.mxu0 0.0
        %1481 = vmatpush2.msra.mxu0 0.0
        %1482 = vmatprep.mubr.f32.mxu0 0.0
        %1483 = vmatmul.mubr.f32.gmra.mxu0 %v877
        %v1484 = vpop.f32.mrf.mxu0
        %v1485 = vadd.f32 0.0, %v1484
        %v1486 = vpop.f32.mrf.mxu0
        %1487 = vmatprep.mubr.f32.mxu0 0.0
        %1488 = vmatmul.mubr.f32.gmra.mxu0 %v880
        %v1489 = vpop.f32.mrf.mxu0
        %v1490 = vadd.f32 0.0, %v1489
        %v1491 = vpop.f32.mrf.mxu0
        %1492 = vdwg.mxu0
        %1493 = vmatprep.subr.mxu0 0.0
        %1494 = vmatpush1.msra.mxu0 0.0
        %1495 = vmatprep.subr.mxu0 0.0
        %1496 = vmatpush1.msra.mxu0 0.0
        %1497 = vmatprep.subr.mxu0 0.0
        %1498 = vmatpush1.msra.mxu0 0.0
        %1499 = vmatprep.subr.mxu0 0.0
        %1500 = vmatpush1.msra.mxu0 0.0
        %1501 = vmatprep.subr.mxu0 0.0
        %1502 = vmatpush1.msra.mxu0 0.0
        %1503 = vmatprep.subr.mxu0 0.0
        %1504 = vmatpush1.msra.mxu0 0.0
        %1505 = vmatprep.subr.mxu0 0.0
        %1506 = vmatpush1.msra.mxu0 0.0
        %1507 = vmatprep.subr.mxu0 0.0
        %1508 = vmatpush1.msra.mxu0 0.0
        %1509 = vmatprep.subr.mxu0 0.0
        %1510 = vmatpush1.msra.mxu0 0.0
        %1511 = vmatprep.subr.mxu0 0.0
        %1512 = vmatpush1.msra.mxu0 0.0
        %1513 = vmatprep.subr.mxu0 0.0
        %1514 = vmatpush1.msra.mxu0 0.0
        %1515 = vmatprep.subr.mxu0 0.0
        %1516 = vmatpush1.msra.mxu0 0.0
        %1517 = vmatprep.subr.mxu0 0.0
        %1518 = vmatpush1.msra.mxu0 0.0
        %1519 = vmatprep.subr.mxu0 0.0
        %1520 = vmatpush1.msra.mxu0 0.0
        %1521 = vmatprep.subr.mxu0 0.0
        %1522 = vmatpush1.msra.mxu0 %v1417
        %1523 = vmatprep.subr.mxu0 0.0
        %1524 = vmatpush1.msra.mxu0 %v1416
        %1525 = vmatprep.subr.mxu0 0.0
        %1526 = vmatpush2.msra.mxu0 0.0
        %1527 = vmatprep.subr.mxu0 0.0
        %1528 = vmatpush2.msra.mxu0 0.0
        %1529 = vmatprep.subr.mxu0 0.0
        %1530 = vmatpush2.msra.mxu0 0.0
        %1531 = vmatprep.subr.mxu0 0.0
        %1532 = vmatpush2.msra.mxu0 0.0
        %1533 = vmatprep.subr.mxu0 0.0
        %1534 = vmatpush2.msra.mxu0 0.0
        %1535 = vmatprep.subr.mxu0 0.0
        %1536 = vmatpush2.msra.mxu0 0.0
        %1537 = vmatprep.subr.mxu0 0.0
        %1538 = vmatpush2.msra.mxu0 0.0
        %1539 = vmatprep.subr.mxu0 0.0
        %1540 = vmatpush2.msra.mxu0 0.0
        %1541 = vmatprep.subr.mxu0 0.0
        %1542 = vmatpush2.msra.mxu0 0.0
        %1543 = vmatprep.subr.mxu0 0.0
        %1544 = vmatpush2.msra.mxu0 0.0
        %1545 = vmatprep.subr.mxu0 0.0
        %1546 = vmatpush2.msra.mxu0 0.0
        %1547 = vmatprep.subr.mxu0 0.0
        %1548 = vmatpush2.msra.mxu0 0.0
        %1549 = vmatprep.subr.mxu0 0.0
        %1550 = vmatpush2.msra.mxu0 0.0
        %1551 = vmatprep.subr.mxu0 0.0
        %1552 = vmatpush2.msra.mxu0 0.0
        %1553 = vmatprep.subr.mxu0 0.0
        %1554 = vmatpush2.msra.mxu0 0.0
        %1555 = vmatprep.subr.mxu0 0.0
        %1556 = vmatpush2.msra.mxu0 0.0
        %1557 = vmatprep.mubr.f32.mxu0 0.0
        %1558 = vmatmul.mubr.f32.gmra.mxu0 %v877
        %v1559 = vpop.f32.mrf.mxu0
        %v1560 = vadd.f32 0.0, %v1559
        %v1561 = vpop.f32.mrf.mxu0
        %1562 = vmatprep.mubr.f32.mxu0 0.0
        %1563 = vmatmul.mubr.f32.gmra.mxu0 %v880
        %v1564 = vpop.f32.mrf.mxu0
        %v1565 = vadd.f32 0.0, %v1564
        %v1566 = vpop.f32.mrf.mxu0
        %1567 = vdwg.mxu0
        %v1568 = vsub.f32 %v1414, %v1485
        %v1569 = vsub.f32 %v1415, %v1490
        %v1570 = vsub.f32 %v1416, %v1560
        %v1571 = vsub.f32 %v1417, %v1565
        %1572 = vst.msk [vmem:[%s332] sm:$0xff] %vm372, %v1568
        %1573 = vst.msk [vmem:[%s332 + $0x8] sm:$0xff] %vm372, %v1569
        %1574 = vst.msk [vmem:[%s332 + $0x10] sm:$0xff] %vm372, %v1570
        %1575 = vst.msk [vmem:[%s332 + $0x18] sm:$0xff] %vm372, %v1571
        %1576 = vst.msk [vmem:[%s339] sm:$0xff] %vm662, %v703
        %1577 = vst.msk [vmem:[%s339 + $0x8] sm:$0xff] %vm662, %v704
        %1578 = vst.msk [vmem:[%s339 + $0x10] sm:$0xff] %vm662, %v705
        %1579 = vst.msk [vmem:[%s339 + $0x18] sm:$0xff] %vm662, %v706
        %s1580 = sand.u32 %s208, 1
        %s1581 = scalar_lea.sflag [#allocation3], %s1580
        %s1582 = sand.u32 %s208, 1
        %s1583 = smul.addr %s1582, 32
        %s1584 = scalar_lea.vmem [#allocation2], %s1583
        %s1585 = sand.u32 %s234, 1
        %s1586 = scalar_lea.sflag [#allocation5], %s1585
        %s1587 = sand.u32 %s234, 1
        %s1588 = smul.addr %s1587, 32
        %s1589 = scalar_lea.vmem [#allocation4], %s1588
        // Predicated region
        $region53: #{forward.1} parent=51 // pred_check
          %p1590 = pneg %p218
        $region54: #{forward.1} parent=51 // pred_check_branch
          %1592 = sbr.rel (%p1590) target = $region56
        $region55: #{forward.1} parent=51 // pred_region
          %s1593 = smul.u32 2, %s27
          %s1595 = ssub.s32 512, 512
          %1596 = vsyncadd %s1581, %s1595
          %s1597 = smul.addr %s1593, 2
          %s1598 = smul.addr %s1597, 128
          %s1599 = scalar_lea.hbm %s8, %s1598
          %s1600 = sshll.u32 %s1584, 4
          %s1601 = int_to_ptr.vmem [resolvable:$true] %s1600
          %1606 = dma.vmem_to_hbm [thread:$0]  %s1601, 512, %s1599, %s1581, 128, 128, 8
        $region56: #{forward.1} parent=51 // pred_fallthru
          _
        // Predicated region
        $region57: #{forward.1} parent=51 // pred_check
          %p1607 = pneg %p244
        $region58: #{forward.1} parent=51 // pred_check_branch
          %1609 = sbr.rel (%p1607) target = $region60
        $region59: #{forward.1} parent=51 // pred_region
          %s1610 = smul.u32 2, %s27
          %s1612 = ssub.s32 512, 512
          %1613 = vsyncadd %s1586, %s1612
          %s1614 = smul.addr %s1610, 2
          %s1615 = smul.addr %s1614, 128
          %s1616 = scalar_lea.hbm %s9, %s1615
          %s1617 = sshll.u32 %s1589, 4
          %s1618 = int_to_ptr.vmem [resolvable:$true] %s1617
          %1623 = dma.vmem_to_hbm [thread:$0]  %s1618, 512, %s1616, %s1586, 128, 128, 8
        $region60: #{forward.1} parent=51 // pred_fallthru
          _
      $region52: #{forward.1} parent=5 // pred_fallthru
        _
      %p1624 = scmp.le.s32.totalorder 2, %s22
      // Predicated region
      $region61: #{forward.1} parent=5 // pred_check
        %p1625 = pneg %p1624
      $region62: #{forward.1} parent=5 // pred_check_branch
        %1627 = sbr.rel (%p1625) target = $region64
      $region63: #{forward.1} parent=5 // pred_region
        %s1628 = ssub.s32 %s22, 2
        // Predicated region
        $region65: #{forward.1} parent=63 // pred_check
          %p1629 = pneg %p224
        $region66: #{forward.1} parent=63 // pred_check_branch
          %1631 = sbr.rel (%p1629) target = $region68
        $region67: #{forward.1} parent=63 // pred_region
          %s1632 = sand.u32 %s209, 1
          %s1633 = scalar_lea.sflag [#allocation3], %s1632
          %s1634 = sand.u32 %s209, 1
          %s1635 = smul.addr %s1634, 32
          %s1636 = scalar_lea.vmem [#allocation2], %s1635
          %1637 = dma.done %s1633, 512
        $region68: #{forward.1} parent=63 // pred_fallthru
          _
        // Predicated region
        $region69: #{forward.1} parent=63 // pred_check
          %p1638 = pneg %p250
        $region70: #{forward.1} parent=63 // pred_check_branch
          %1640 = sbr.rel (%p1638) target = $region72
        $region71: #{forward.1} parent=63 // pred_region
          %s1641 = sand.u32 %s235, 1
          %s1642 = scalar_lea.sflag [#allocation5], %s1641
          %s1643 = sand.u32 %s235, 1
          %s1644 = smul.addr %s1643, 32
          %s1645 = scalar_lea.vmem [#allocation4], %s1644
          %1646 = dma.done %s1642, 512
        $region72: #{forward.1} parent=63 // pred_fallthru
          _
      $region64: #{forward.1} parent=5 // pred_fallthru
        _
    $region6: #{forward.1} parent=1 // loop_footer
      %s26 = sadd.s32 1, %s22
    $region7: #{forward.1} parent=1 // loop_footer_branch
      %21 = sbr.rel target = $region3
    $region8: #{forward.1} parent=1 // loop_exit
      _
    %1647 = vsyncpa [#allocation3], 1
    %s1648 = scalar_lea.sflag [#allocation3], 1
    %1649 = vsyncpa %s1648, 1
    %1650 = vsyncpa [#allocation5], 1
    %s1651 = scalar_lea.sflag [#allocation5], 1
    %1652 = vsyncpa %s1651, 1

</llo_original>
